<compile_context>
chip_gen: v7x
topology: tpu7x:2x2x1
jax: 0.10.0
libtpu: 0.0.40
codegen_flags: <defaults>
</compile_context>

<pallas_src>
import functools
import math

import jax
import jax.numpy as jnp
from jax import lax
from jax.experimental import pallas as pl
from jax.experimental.pallas import tpu as pltpu


# 64 MiB scoped VMEM: safe on v5e/v6e (128 MiB physical); on v7x (64 MiB
# physical) the actual per-call footprint below stays well under the limit
# because weights/activations are bf16 by default.
_VMEM_LIMIT = 64 * 1024 * 1024


def _pick_block(n, target):
    """Largest block <= min(n, target) dividing n; prefer 128-multiples
    (lane/MXU dense), then 8-multiples (sublane)."""
    if n <= target:
        return n
    t = (target // 128) * 128
    while t >= 128:
        if n % t == 0:
            return t
        t -= 128
    t = (target // 8) * 8
    while t >= 8:
        if n % t == 0:
            return t
        t -= 8
    # TODO(synk): ragged tails (no clean divisor) fall back to one big block;
    # for awkward S consider padding the sequence outside the kernel.
    return n


# --------------------------- fused Q/K/V projections ----------------------- #

def _qkv_fused_kernel(x_ref, w_ref, b_ref, q_ref, k_ref, v_ref, *, d):
    # Single weight-stationary MXU pass: (tn,d) x (d,3d); slices are d-aligned.
    y = jnp.dot(x_ref[...], w_ref[...],
                preferred_element_type=jnp.float32) + b_ref[...]
    q_ref[...] = y[:, :d].astype(q_ref.dtype)
    k_ref[...] = y[:, d:2 * d].astype(k_ref.dtype)
    v_ref[...] = y[:, 2 * d:].astype(v_ref.dtype)


def qkv_projection_fused(x, w_qkv_t, b_qkv, *, row_block=1024):
    """Self-attention path: Q|K|V = x @ [wq_t | wk_t | wv_t] + [bq|bk|bv]."""
    n, d = x.shape
    tn = _pick_block(n, row_block)
    grid = (n // tn,)

    row_spec = pl.BlockSpec((tn, d), lambda i: (i, 0))
    out_sds = jax.ShapeDtypeStruct((n, d), x.dtype)
    itm_x = jnp.dtype(x.dtype).itemsize
    itm_w = jnp.dtype(w_qkv_t.dtype).itemsize
    cost = pl.CostEstimate(
        flops=2 * n * d * 3 * d,
        transcendentals=0,
        bytes_accessed=n * d * itm_x + 3 * d * d * itm_w + 3 * n * d * itm_x)

    return pl.pallas_call(
        functools.partial(_qkv_fused_kernel, d=d),
        out_shape=(out_sds, out_sds, out_sds),
        grid_spec=pltpu.PrefetchScalarGridSpec(
            num_scalar_prefetch=0,
            grid=grid,
            in_specs=[row_spec,
                      pl.BlockSpec((d, 3 * d), lambda i: (0, 0)),   # resident
                      pl.BlockSpec((1, 3 * d), lambda i: (0, 0))],
            out_specs=[row_spec, row_spec, row_spec],
        ),
        compiler_params=pltpu.CompilerParams(
            dimension_semantics=("parallel",),
            vmem_limit_bytes=_VMEM_LIMIT),
        cost_estimate=cost,
    )(x, w_qkv_t, b_qkv.reshape(1, 3 * d))


def _qkv_proj3_kernel(xq_ref, xk_ref, xv_ref,
                      wq_ref, wk_ref, wv_ref,
                      bq_ref, bk_ref, bv_ref,
                      q_ref, k_ref, v_ref):
    q_ref[...] = (jnp.dot(xq_ref[...], wq_ref[...],
                          preferred_element_type=jnp.float32)
                  + bq_ref[...]).astype(q_ref.dtype)
    k_ref[...] = (jnp.dot(xk_ref[...], wk_ref[...],
                          preferred_element_type=jnp.float32)
                  + bk_ref[...]).astype(k_ref.dtype)
    v_ref[...] = (jnp.dot(xv_ref[...], wv_ref[...],
                          preferred_element_type=jnp.float32)
                  + bv_ref[...]).astype(v_ref.dtype)


def qkv_projection(xq, xk, xv, wq_t, wk_t, wv_t, bq, bk, bv, *, row_block=1024):
    """Cross-attention path (distinct q/k/v inputs): three resident weights."""
    n, d = xq.shape
    tn = _pick_block(n, row_block)
    grid = (n // tn,)

    row_spec = pl.BlockSpec((tn, d), lambda i: (i, 0))
    w_spec = pl.BlockSpec((d, d), lambda i: (0, 0))       # weights stay resident
    b_spec = pl.BlockSpec((1, d), lambda i: (0, 0))
    out_sds = jax.ShapeDtypeStruct((n, d), xq.dtype)
    itm_x = jnp.dtype(xq.dtype).itemsize
    itm_w = jnp.dtype(wq_t.dtype).itemsize
    cost = pl.CostEstimate(
        flops=3 * 2 * n * d * d,
        transcendentals=0,
        bytes_accessed=3 * n * d * itm_x + 3 * d * d * itm_w + 3 * n * d * itm_x)

    return pl.pallas_call(
        _qkv_proj3_kernel,
        out_shape=(out_sds, out_sds, out_sds),
        grid_spec=pltpu.PrefetchScalarGridSpec(
            num_scalar_prefetch=0,
            grid=grid,
            in_specs=[row_spec, row_spec, row_spec,
                      w_spec, w_spec, w_spec,
                      b_spec, b_spec, b_spec],
            out_specs=[row_spec, row_spec, row_spec],
        ),
        compiler_params=pltpu.CompilerParams(
            dimension_semantics=("parallel",),
            vmem_limit_bytes=_VMEM_LIMIT),
        cost_estimate=cost,
    )(xq, xk, xv, wq_t, wk_t, wv_t,
      bq.reshape(1, d), bk.reshape(1, d), bv.reshape(1, d))


# ---------------- flash attention (online softmax) + fused ff -------------- #

def _flash_attn_ff_kernel(q_ref, k_ref, v_ref, wff_ref, bff_ref, o_ref,
                          m_sc, l_sc, acc_sc, *, num_head, head_dim):
    ki = pl.program_id(2)

    @pl.when(ki == 0)
    def _init():
        m_sc[...] = jnp.full_like(m_sc, -jnp.inf)
        l_sc[...] = jnp.zeros_like(l_sc)
        acc_sc[...] = jnp.zeros_like(acc_sc)

    q = q_ref[0]          # (TQ, D)  -- heads live in static column slices
    k = k_ref[0]          # (TK, D)
    v = v_ref[0]          # (TK, D)

    # TODO(synk): for very large num_head the fully unrolled head loop can
    # create vreg pressure; in that regime move heads to a grid axis instead.
    for h in range(num_head):
        cols = slice(h * head_dim, (h + 1) * head_dim)
        qh = q[:, cols]
        kh = k[:, cols]
        vh = v[:, cols]
        # 1/sqrt(Dh) is folded into the Q projection weights; contract the last
        # dims directly (no explicit K transpose).
        s = lax.dot_general(qh, kh, (((1,), (1,)), ((), ())),
                            preferred_element_type=jnp.float32)     # (TQ, TK)

        m_prev = m_sc[h]                                             # (TQ, 1)
        m_new = jnp.maximum(m_prev, jnp.max(s, axis=-1, keepdims=True))
        alpha = jnp.exp(m_prev - m_new)
        p = jnp.exp(s - m_new)
        # l is kept lane-broadcast across each head's Dh columns so the
        # finalize normalization is a single full-tile elementwise op.
        l_sc[:, cols] = alpha * l_sc[:, cols] + jnp.sum(p, axis=-1,
                                                        keepdims=True)
        acc_sc[:, cols] = alpha * acc_sc[:, cols] + jnp.dot(
            p.astype(vh.dtype), vh, preferred_element_type=jnp.float32)
        m_sc[h] = m_new

    @pl.when(ki == pl.num_programs(2) - 1)
    def _finalize():
        # Exact reciprocal: the denominator scales the output directly and the
        # cost is negligible (finalize only).  Normalized result feeds the ff
        # matmul in registers -- no per-head write-back / re-read of scratch.
        attn = acc_sc[...] * pl.reciprocal(l_sc[...], approx=False)
        out = jnp.dot(attn.astype(wff_ref.dtype), wff_ref[...],
                      preferred_element_type=jnp.float32) + bff_ref[...]
        o_ref[0] = out.astype(o_ref.dtype)


def attention_ff(q, k, v, wff_t, bff, *, num_head,
                 block_q=256, block_k=256, kv_buffers=2):
    """softmax(Q K^T) V followed by the fused output projection.

    q, k, v: (B, S, D) with heads as contiguous column groups of width D//H.
    Returns (B, S, D) in float32.
    """
    b, s, d = q.shape
    head_dim = d // num_head
    tq = _pick_block(s, block_q)
    tk = _pick_block(s, block_k)
    grid = (b, s // tq, s // tk)

    kv_kwargs = {}
    if kv_buffers > 2:
        # Deeper buffering on the streamed KV axis if the DMA is exposed.
        kv_kwargs["pipeline_mode"] = pl.Buffered(kv_buffers)

    q_spec = pl.BlockSpec((1, tq, d), lambda bi, qi, ki: (bi, qi, 0))
    kv_spec = pl.BlockSpec((1, tk, d), lambda bi, qi, ki: (bi, ki, 0),
                           **kv_kwargs)
    w_spec = pl.BlockSpec((d, d), lambda bi, qi, ki: (0, 0))
    b_spec = pl.BlockSpec((1, d), lambda bi, qi, ki: (0, 0))
    o_spec = pl.BlockSpec((1, tq, d), lambda bi, qi, ki: (bi, qi, 0))

    itm = jnp.dtype(q.dtype).itemsize
    cost = pl.CostEstimate(
        flops=4 * b * num_head * s * s * head_dim + 2 * b * s * d * d,
        transcendentals=b * num_head * s * s,
        bytes_accessed=(3 * b * s * d * itm + b * s * d * 4
                        + d * d * jnp.dtype(wff_t.dtype).itemsize))

    kernel = functools.partial(_flash_attn_ff_kernel,
                               num_head=num_head, head_dim=head_dim)

    return pl.pallas_call(
        kernel,
        out_shape=jax.ShapeDtypeStruct((b, s, d), jnp.float32),
        grid_spec=pltpu.PrefetchScalarGridSpec(
            num_scalar_prefetch=0,
            grid=grid,
            in_specs=[q_spec, kv_spec, kv_spec, w_spec, b_spec],
            out_specs=o_spec,
            scratch_shapes=[
                pltpu.VMEM((num_head, tq, 1), jnp.float32),  # running max / head
                pltpu.VMEM((tq, d), jnp.float32),            # denom, lane-bcast
                pltpu.VMEM((tq, d), jnp.float32),            # output accumulator
            ],
        ),
        compiler_params=pltpu.CompilerParams(
            # b * (s/tq) should be >= 2 (and even) so both v7x TCs get work.
            dimension_semantics=("parallel", "parallel", "arbitrary"),
            vmem_limit_bytes=_VMEM_LIMIT),
        cost_estimate=cost,
    )(q, k, v, wff_t, bff.reshape(1, d))


# ----------------------------- module wrapper ------------------------------ #

class AttentionPallas:
    def __init__(self, dim, num_head, seq_len, key, *,
                 compute_dtype=jnp.bfloat16,
                 block_q=256, block_k=256, row_block=1024, kv_buffers=2):
        assert dim % num_head == 0
        self.dim = dim
        self.num_head = num_head
        self.head_dim = dim // num_head
        self.seq_len = seq_len
        self.compute_dtype = jnp.dtype(compute_dtype)
        self.block_q = block_q
        self.block_k = block_k
        self.row_block = row_block
        self.kv_buffers = kv_buffers

        k1, k2 = jax.random.split(key, 2)
        # in_proj_weight: xavier_uniform_ on (3*dim, dim); bias = 0
        fan_in, fan_out = dim, 3 * dim
        bound = math.sqrt(6.0 / (fan_in + fan_out))
        self.in_proj_weight = jax.random.uniform(
            k1, (3 * dim, dim), jnp.float32, -bound, bound)
        self.in_proj_bias = jnp.zeros((3 * dim,), jnp.float32)
        # ff: nn.Linear(dim, dim) default kaiming-uniform weight; bias = 0
        ff_bound = 1.0 / math.sqrt(dim)
        self.ff_weight = jax.random.uniform(
            k2, (dim, dim), jnp.float32, -ff_bound, ff_bound)
        self.ff_bias = jnp.zeros((dim,), jnp.float32)

        # Derived parameters: transpose for row-major matmuls, fold the
        # 1/sqrt(head_dim) attention scale into the Q projection (in f32,
        # before the single cast to compute_dtype), store in compute dtype.
        cdt = self.compute_dtype
        scale = 1.0 / math.sqrt(self.head_dim)
        wq_t = self.in_proj_weight[:dim, :].T * scale
        wk_t = self.in_proj_weight[dim:2 * dim, :].T
        wv_t = self.in_proj_weight[2 * dim:, :].T
        self.wq_t = wq_t.astype(cdt)
        self.wk_t = wk_t.astype(cdt)
        self.wv_t = wv_t.astype(cdt)
        self.w_qkv_t = jnp.concatenate([wq_t, wk_t, wv_t], axis=1).astype(cdt)
        self.bq = self.in_proj_bias[:dim] * scale            # biases stay f32
        self.bk = self.in_proj_bias[dim:2 * dim]
        self.bv = self.in_proj_bias[2 * dim:]
        self.b_qkv = jnp.concatenate([self.bq, self.bk, self.bv])
        self.wff_t = self.ff_weight.T.astype(cdt)

    def __call__(self, query, key, value, attn_mask=None, key_padding_mask=None):
        # query/key/value: (S, B, D) seq-first, like nn.MultiheadAttention.
        # TODO(synk): attn_mask / key_padding_mask / dropout(0.1) unimplemented.
        assert attn_mask is None and key_padding_mask is None
        D, H = self.dim, self.num_head
        cdt = self.compute_dtype
        self_attention = (query is key) and (key is value)

        q = jnp.transpose(query, (1, 0, 2)).astype(cdt)   # (B, S, D)
        B, S, _ = q.shape
        N = B * S

        if self_attention:
            Q, K, V = qkv_projection_fused(
                q.reshape(N, D), self.w_qkv_t, self.b_qkv,
                row_block=self.row_block)
        else:
            k = jnp.transpose(key, (1, 0, 2)).astype(cdt)
            v = jnp.transpose(value, (1, 0, 2)).astype(cdt)
            Q, K, V = qkv_projection(
                q.reshape(N, D), k.reshape(N, D), v.reshape(N, D),
                self.wq_t, self.wk_t, self.wv_t, self.bq, self.bk, self.bv,
                row_block=self.row_block)

        # Heads stay as column groups of the (B, S, D) layout -> no
        # split_heads / combine_heads transposes; ff is fused in the kernel.
        out = attention_ff(
            Q.reshape(B, S, D), K.reshape(B, S, D), V.reshape(B, S, D),
            self.wff_t, self.ff_bias,
            num_head=H, block_q=self.block_q, block_k=self.block_k,
            kv_buffers=self.kv_buffers)

        out = jnp.transpose(out, (1, 0, 2))   # back to (S, B, D), float32
        return out, None


# ----------------------------- reference checks ----------------------------- #

def reference_forward_f32(mod, query, key, value):
    """Original PyTorch math, pure f32 (highest matmul precision)."""
    hp = jax.lax.Precision.HIGHEST
    D, H, Dh = mod.dim, mod.num_head, mod.head_dim
    q = jnp.transpose(query, (1, 0, 2))
    k = jnp.transpose(key, (1, 0, 2))
    v = jnp.transpose(value, (1, 0, 2))
    B, S, _ = q.shape

    Q = jnp.einsum("bsd,ed->bse", q, mod.in_proj_weight[:D],
                   precision=hp) + mod.in_proj_bias[:D]
    K = jnp.einsum("bsd,ed->bse", k, mod.in_proj_weight[D:2 * D],
                   precision=hp) + mod.in_proj_bias[D:2 * D]
    V = jnp.einsum("bsd,ed->bse", v, mod.in_proj_weight[2 * D:],
                   precision=hp) + mod.in_proj_bias[2 * D:]

    def split(x):
        return jnp.transpose(x.reshape(B, S, H, Dh), (0, 2, 1, 3))

    Qh, Kh, Vh = split(Q), split(K), split(V)
    s = jnp.einsum("bhqd,bhkd->bhqk", Qh, Kh, precision=hp) / math.sqrt(Dh)
    p = jax.nn.softmax(s, axis=-1)
    o = jnp.einsum("bhqk,bhkd->bhqd", p, Vh, precision=hp)
    comb = jnp.transpose(o, (0, 2, 1, 3)).reshape(B, S, D)
    out = jnp.einsum("bsd,ed->bse", comb, mod.ff_weight,
                     precision=hp) + mod.ff_bias
    return jnp.transpose(out, (1, 0, 2))


def reference_forward_mixed(mod, query, key, value):
    """Mirror of the kernel's mixed-precision policy (uses derived weights)."""
    f32 = jnp.float32
    cdt = mod.compute_dtype
    D, H, Dh = mod.dim, mod.num_head, mod.head_dim
    q = jnp.transpose(query, (1, 0, 2)).astype(cdt)
    k = jnp.transpose(key, (1, 0, 2)).astype(cdt)
    v = jnp.transpose(value, (1, 0, 2)).astype(cdt)
    B, S, _ = q.shape

    Q = (jnp.einsum("bsd,de->bse", q, mod.wq_t,
                    preferred_element_type=f32) + mod.bq).astype(cdt)
    K = (jnp.einsum("bsd,de->bse", k, mod.wk_t,
                    preferred_element_type=f32) + mod.bk).astype(cdt)
    V = (jnp.einsum("bsd,de->bse", v, mod.wv_t,
                    preferred_element_type=f32) + mod.bv).astype(cdt)

    def split(x):
        return jnp.transpose(x.reshape(B, S, H, Dh), (0, 2, 1, 3))

    Qh, Kh, Vh = split(Q), split(K), split(V)
    s = jnp.einsum("bhqd,bhkd->bhqk", Qh, Kh, preferred_element_type=f32)
    p = jax.nn.softmax(s, axis=-1).astype(cdt)
    o = jnp.einsum("bhqk,bhkd->bhqd", p, Vh, preferred_element_type=f32)
    comb = jnp.transpose(o, (0, 2, 1, 3)).reshape(B, S, D).astype(cdt)
    out = jnp.einsum("bsd,de->bse", comb, mod.wff_t,
                     preferred_element_type=f32) + mod.ff_bias
    return jnp.transpose(out, (1, 0, 2))


if __name__ == "__main__":
    # Small but multi-tile: attention grid (B=2, S/TQ=2, S/TK=2), QKV row grid 2.
    seq_len, batch, dim, num_head = 64, 2, 32, 4

    root = jax.random.PRNGKey(0)
    kp, kq, kk, kv = jax.random.split(root, 4)

    query = jax.random.normal(kq, (seq_len, batch, dim), jnp.float32)
    key = jax.random.normal(kk, (seq_len, batch, dim), jnp.float32)
    value = jax.random.normal(kv, (seq_len, batch, dim), jnp.float32)

    # 1) f32 compute, distinct q/k/v (three-weight projection kernel).
    mod_f32 = AttentionPallas(dim, num_head, seq_len, kp,
                              compute_dtype=jnp.float32,
                              block_q=32, block_k=32, row_block=64)
    out_f32, _ = mod_f32(query, key, value)
    out_f32 = jax.block_until_ready(out_f32)
    ref_f32 = reference_forward_f32(mod_f32, query, key, value)
    assert out_f32.shape == (seq_len, batch, dim)
    assert jnp.allclose(out_f32, ref_f32, atol=2e-2, rtol=2e-2), "f32 mismatch"

    # 2) Self-attention path (single fused (d,3d) QKV projection kernel).
    out_sa, _ = mod_f32(query, query, query)
    out_sa = jax.block_until_ready(out_sa)
    ref_sa = reference_forward_f32(mod_f32, query, query, query)
    assert jnp.allclose(out_sa, ref_sa, atol=2e-2, rtol=2e-2), "self-attn mismatch"

    # 3) Default bf16 compute path vs a mixed-precision mirror reference.
    mod_bf16 = AttentionPallas(dim, num_head, seq_len, kp,
                               compute_dtype=jnp.bfloat16,
                               block_q=32, block_k=32, row_block=64)
    out_bf16, _ = mod_bf16(query, key, value)
    out_bf16 = jax.block_until_ready(out_bf16)
    ref_bf16 = reference_forward_mixed(mod_bf16, query, key, value)
    assert jnp.allclose(out_bf16, ref_bf16, atol=2e-2, rtol=2e-2), "bf16 mismatch"

    print("KERNEL_OK")
</pallas_src>

<mosaic_0001>
module attributes {stable_mosaic.version = 11 : i64} {
  func.func @_qkv_proj3_kernel(%arg0: i32, %arg1: memref<64x32xf32, #tpu.memory_space<vmem>>, %arg2: memref<64x32xf32, #tpu.memory_space<vmem>>, %arg3: memref<64x32xf32, #tpu.memory_space<vmem>>, %arg4: memref<32x32xf32, #tpu.memory_space<vmem>>, %arg5: memref<32x32xf32, #tpu.memory_space<vmem>>, %arg6: memref<32x32xf32, #tpu.memory_space<vmem>>, %arg7: memref<1x32xf32, #tpu.memory_space<vmem>>, %arg8: memref<1x32xf32, #tpu.memory_space<vmem>>, %arg9: memref<1x32xf32, #tpu.memory_space<vmem>>, %arg10: memref<64x32xf32, #tpu.memory_space<vmem>>, %arg11: memref<64x32xf32, #tpu.memory_space<vmem>>, %arg12: memref<64x32xf32, #tpu.memory_space<vmem>>) attributes {dimension_semantics = [#tpu.dimension_semantics<parallel>], iteration_bounds = array<i64: 2>, scalar_prefetch = 0 : i64, scratch_operands = 0 : i64, tpu.core_type = #tpu.core_type<tc>, window_params = [{transform_indices = @transform_0, window_bounds = array<i64: 64, 32>}, {transform_indices = @transform_1, window_bounds = array<i64: 64, 32>}, {transform_indices = @transform_2, window_bounds = array<i64: 64, 32>}, {pipeline_mode = #tpu.pipeline_mode<synchronous>, transform_indices = @transform_3, window_bounds = array<i64: 32, 32>}, {pipeline_mode = #tpu.pipeline_mode<synchronous>, transform_indices = @transform_4, window_bounds = array<i64: 32, 32>}, {pipeline_mode = #tpu.pipeline_mode<synchronous>, transform_indices = @transform_5, window_bounds = array<i64: 32, 32>}, {pipeline_mode = #tpu.pipeline_mode<synchronous>, transform_indices = @transform_6, window_bounds = array<i64: 1, 32>}, {pipeline_mode = #tpu.pipeline_mode<synchronous>, transform_indices = @transform_7, window_bounds = array<i64: 1, 32>}, {pipeline_mode = #tpu.pipeline_mode<synchronous>, transform_indices = @transform_8, window_bounds = array<i64: 1, 32>}, {transform_indices = @transform_9, window_bounds = array<i64: 64, 32>}, {transform_indices = @transform_10, window_bounds = array<i64: 64, 32>}, {transform_indices = @transform_11, window_bounds = array<i64: 64, 32>}]} {
    %c0 = arith.constant 0 : index
    %c0_0 = arith.constant 0 : index
    %0 = vector.load %arg1[%c0, %c0_0] : memref<64x32xf32, #tpu.memory_space<vmem>>, vector<64x32xf32>
    %c0_1 = arith.constant 0 : index
    %c0_2 = arith.constant 0 : index
    %1 = vector.load %arg4[%c0_1, %c0_2] : memref<32x32xf32, #tpu.memory_space<vmem>>, vector<32x32xf32>
    %cst = arith.constant dense<0.000000e+00> : vector<64x32xf32>
    %2 = tpu.matmul %0, %1, %cst {dimension_numbers = #tpu.dot_dimension_numbers<[1], [0], [0], [1], [0, 0, 1, 1], [], []>} : vector<64x32xf32>, vector<32x32xf32>, vector<64x32xf32> -> vector<64x32xf32>
    %c0_3 = arith.constant 0 : index
    %c0_4 = arith.constant 0 : index
    %3 = vector.load %arg7[%c0_3, %c0_4] : memref<1x32xf32, #tpu.memory_space<vmem>>, vector<1x32xf32>
    %4 = vector.broadcast %3 : vector<1x32xf32> to vector<64x32xf32>
    %5 = arith.addf %2, %4 : vector<64x32xf32>
    %c0_5 = arith.constant 0 : index
    %c0_6 = arith.constant 0 : index
    %6 = vector.load %arg10[%c0_5, %c0_6] : memref<64x32xf32, #tpu.memory_space<vmem>>, vector<64x32xf32>
    tpu.vector_store %arg10[%c0_5, %c0_6], %5 {strides = array<i32>} : memref<64x32xf32, #tpu.memory_space<vmem>>, vector<64x32xf32>,
    %c0_7 = arith.constant 0 : index
    %c0_8 = arith.constant 0 : index
    %7 = vector.load %arg2[%c0_7, %c0_8] : memref<64x32xf32, #tpu.memory_space<vmem>>, vector<64x32xf32>
    %c0_9 = arith.constant 0 : index
    %c0_10 = arith.constant 0 : index
    %8 = vector.load %arg5[%c0_9, %c0_10] : memref<32x32xf32, #tpu.memory_space<vmem>>, vector<32x32xf32>
    %cst_11 = arith.constant dense<0.000000e+00> : vector<64x32xf32>
    %9 = tpu.matmul %7, %8, %cst_11 {dimension_numbers = #tpu.dot_dimension_numbers<[1], [0], [0], [1], [0, 0, 1, 1], [], []>} : vector<64x32xf32>, vector<32x32xf32>, vector<64x32xf32> -> vector<64x32xf32>
    %c0_12 = arith.constant 0 : index
    %c0_13 = arith.constant 0 : index
    %10 = vector.load %arg8[%c0_12, %c0_13] : memref<1x32xf32, #tpu.memory_space<vmem>>, vector<1x32xf32>
    %11 = vector.broadcast %10 : vector<1x32xf32> to vector<64x32xf32>
    %12 = arith.addf %9, %11 : vector<64x32xf32>
    %c0_14 = arith.constant 0 : index
    %c0_15 = arith.constant 0 : index
    %13 = vector.load %arg11[%c0_14, %c0_15] : memref<64x32xf32, #tpu.memory_space<vmem>>, vector<64x32xf32>
    tpu.vector_store %arg11[%c0_14, %c0_15], %12 {strides = array<i32>} : memref<64x32xf32, #tpu.memory_space<vmem>>, vector<64x32xf32>,
    %c0_16 = arith.constant 0 : index
    %c0_17 = arith.constant 0 : index
    %14 = vector.load %arg3[%c0_16, %c0_17] : memref<64x32xf32, #tpu.memory_space<vmem>>, vector<64x32xf32>
    %c0_18 = arith.constant 0 : index
    %c0_19 = arith.constant 0 : index
    %15 = vector.load %arg6[%c0_18, %c0_19] : memref<32x32xf32, #tpu.memory_space<vmem>>, vector<32x32xf32>
    %cst_20 = arith.constant dense<0.000000e+00> : vector<64x32xf32>
    %16 = tpu.matmul %14, %15, %cst_20 {dimension_numbers = #tpu.dot_dimension_numbers<[1], [0], [0], [1], [0, 0, 1, 1], [], []>} : vector<64x32xf32>, vector<32x32xf32>, vector<64x32xf32> -> vector<64x32xf32>
    %c0_21 = arith.constant 0 : index
    %c0_22 = arith.constant 0 : index
    %17 = vector.load %arg9[%c0_21, %c0_22] : memref<1x32xf32, #tpu.memory_space<vmem>>, vector<1x32xf32>
    %18 = vector.broadcast %17 : vector<1x32xf32> to vector<64x32xf32>
    %19 = arith.addf %16, %18 : vector<64x32xf32>
    %c0_23 = arith.constant 0 : index
    %c0_24 = arith.constant 0 : index
    %20 = vector.load %arg12[%c0_23, %c0_24] : memref<64x32xf32, #tpu.memory_space<vmem>>, vector<64x32xf32>
    tpu.vector_store %arg12[%c0_23, %c0_24], %19 {strides = array<i32>} : memref<64x32xf32, #tpu.memory_space<vmem>>, vector<64x32xf32>,
    return
  }
  func.func @transform_0(%arg0: i32) -> (i32, i32) {
    %c0_i32 = arith.constant 0 : i32
    %c0_i32_0 = arith.constant 0 : i32
    return %arg0, %c0_i32 : i32, i32
  }
  func.func @transform_1(%arg0: i32) -> (i32, i32) {
    %c0_i32 = arith.constant 0 : i32
    %c0_i32_0 = arith.constant 0 : i32
    return %arg0, %c0_i32 : i32, i32
  }
  func.func @transform_2(%arg0: i32) -> (i32, i32) {
    %c0_i32 = arith.constant 0 : i32
    %c0_i32_0 = arith.constant 0 : i32
    return %arg0, %c0_i32 : i32, i32
  }
  func.func @transform_3(%arg0: i32) -> (i32, i32) {
    %c0_i32 = arith.constant 0 : i32
    %c0_i32_0 = arith.constant 0 : i32
    %c0_i32_1 = arith.constant 0 : i32
    return %c0_i32, %c0_i32_0 : i32, i32
  }
  func.func @transform_4(%arg0: i32) -> (i32, i32) {
    %c0_i32 = arith.constant 0 : i32
    %c0_i32_0 = arith.constant 0 : i32
    %c0_i32_1 = arith.constant 0 : i32
    return %c0_i32, %c0_i32_0 : i32, i32
  }
  func.func @transform_5(%arg0: i32) -> (i32, i32) {
    %c0_i32 = arith.constant 0 : i32
    %c0_i32_0 = arith.constant 0 : i32
    %c0_i32_1 = arith.constant 0 : i32
    return %c0_i32, %c0_i32_0 : i32, i32
  }
  func.func @transform_6(%arg0: i32) -> (i32, i32) {
    %c0_i32 = arith.constant 0 : i32
    %c0_i32_0 = arith.constant 0 : i32
    %c0_i32_1 = arith.constant 0 : i32
    return %c0_i32, %c0_i32_0 : i32, i32
  }
  func.func @transform_7(%arg0: i32) -> (i32, i32) {
    %c0_i32 = arith.constant 0 : i32
    %c0_i32_0 = arith.constant 0 : i32
    %c0_i32_1 = arith.constant 0 : i32
    return %c0_i32, %c0_i32_0 : i32, i32
  }
  func.func @transform_8(%arg0: i32) -> (i32, i32) {
    %c0_i32 = arith.constant 0 : i32
    %c0_i32_0 = arith.constant 0 : i32
    %c0_i32_1 = arith.constant 0 : i32
    return %c0_i32, %c0_i32_0 : i32, i32
  }
  func.func @transform_9(%arg0: i32) -> (i32, i32) {
    %c0_i32 = arith.constant 0 : i32
    %c0_i32_0 = arith.constant 0 : i32
    return %arg0, %c0_i32 : i32, i32
  }
  func.func @transform_10(%arg0: i32) -> (i32, i32) {
    %c0_i32 = arith.constant 0 : i32
    %c0_i32_0 = arith.constant 0 : i32
    return %arg0, %c0_i32 : i32, i32
  }
  func.func @transform_11(%arg0: i32) -> (i32, i32) {
    %c0_i32 = arith.constant 0 : i32
    %c0_i32_0 = arith.constant 0 : i32
    return %arg0, %c0_i32 : i32, i32
  }
}

</mosaic_0001>

<llo_original>
// kernel: tpu_custom_call.1
$region0: #{tpu_custom_call.1}
  #allocation0 [shape = 'u32[]', space=smem, size = 0x4, offset = 0x4, fixed_abs, tag = 'smem constant byte address 0x4 - core index']
  #allocation1 [shape = 'u32[144,128]{1,0:T(1,128)}', space=vmem, size = 0x12000, scoped, tag = 'internal scratch']
  %s0 = inlined_call_operand.hbm [shape: f32[128,32], index: 0, kind: input, shape index: {}]
  %s1 = inlined_call_operand.hbm [shape: f32[128,32], index: 1, kind: input, shape index: {}]
  %s2 = inlined_call_operand.hbm [shape: f32[128,32], index: 2, kind: input, shape index: {}]
  %s3 = inlined_call_operand.hbm [shape: f32[32,32], index: 3, kind: input, shape index: {}]
  %s4 = inlined_call_operand.hbm [shape: f32[32,32], index: 4, kind: input, shape index: {}]
  %s5 = inlined_call_operand.hbm [shape: f32[32,32], index: 5, kind: input, shape index: {}]
  %s6 = inlined_call_operand.hbm [shape: f32[1,32], index: 6, kind: input, shape index: {}]
  %s7 = inlined_call_operand.hbm [shape: f32[1,32], index: 7, kind: input, shape index: {}]
  %s8 = inlined_call_operand.hbm [shape: f32[1,32], index: 8, kind: input, shape index: {}]
  %s9 = inlined_call_operand.hbm [shape: f32[128,32], index: 9, kind: output, shape index: {0}]
  %s10 = inlined_call_operand.hbm [shape: f32[128,32], index: 10, kind: output, shape index: {1}]
  %s11 = inlined_call_operand.hbm [shape: f32[128,32], index: 11, kind: output, shape index: {2}]
  %12 = xla_tuple %s9, %s10, %s11
  %s13 = sld [smem:[#allocation0]]
  $region121: #{tpu_custom_call.1} parent=0
    _
  %s15 = ssub.s32 1, %s13
  %s16 = scalar_select 0, %s15, %s13
  $region1: #{tpu_custom_call.1} parent=0
    #allocation2 [shape = 'u8[65536]{0}', space=vmem, size = 0x10000, scoped, tag = 'input window, operand 0']
    #allocation3 [shape = 's32[2]{0}', space=sflag, size = 0x8, scoped, tag = 'scoped memory for tpu_custom_call.1']
    #allocation4 [shape = 's32[2]{0}', space=sflag, size = 0x8, scoped, tag = 'scoped memory for tpu_custom_call.1']
    #allocation5 [shape = 'u8[65536]{0}', space=vmem, size = 0x10000, scoped, tag = 'input window, operand 1']
    #allocation6 [shape = 's32[2]{0}', space=sflag, size = 0x8, scoped, tag = 'scoped memory for tpu_custom_call.1']
    #allocation7 [shape = 'u8[65536]{0}', space=vmem, size = 0x10000, scoped, tag = 'input window, operand 2']
    #allocation8 [shape = 'u8[16384]{0}', space=vmem, size = 0x4000, scoped, tag = 'input window, operand 3, single buffered']
    #allocation9 [shape = 's32[1]{0}', space=sflag, size = 0x4, scoped, tag = 'scoped memory for tpu_custom_call.1']
    #allocation10 [shape = 'u8[16384]{0}', space=vmem, size = 0x4000, scoped, tag = 'input window, operand 4, single buffered']
    #allocation11 [shape = 'u8[16384]{0}', space=vmem, size = 0x4000, scoped, tag = 'input window, operand 5, single buffered']
    #allocation12 [shape = 's32[1]{0}', space=sflag, size = 0x4, scoped, tag = 'scoped memory for tpu_custom_call.1']
    #allocation13 [shape = 'u8[512]{0}', space=vmem, size = 0x400, scoped, tag = 'input window, operand 6, single buffered']
    #allocation14 [shape = 'u8[512]{0}', space=vmem, size = 0x400, scoped, tag = 'input window, operand 7, single buffered']
    #allocation15 [shape = 's32[1]{0}', space=sflag, size = 0x4, scoped, tag = 'scoped memory for tpu_custom_call.1']
    #allocation16 [shape = 'u8[512]{0}', space=vmem, size = 0x400, scoped, tag = 'input window, operand 8, single buffered']
    #allocation17 [shape = 'u8[65536]{0}', space=vmem, size = 0x10000, scoped, tag = 'output window, operand 0']
    #allocation18 [shape = 'u8[65536]{0}', space=vmem, size = 0x10000, scoped, tag = 'output window, operand 1']
    #allocation19 [shape = 's32[2]{0}', space=sflag, size = 0x8, scoped, tag = 'scoped memory for tpu_custom_call.1']
    #allocation20 [shape = 'u8[65536]{0}', space=vmem, size = 0x10000, scoped, tag = 'output window, operand 2']
    %17 = vsyncpa [#allocation3], 0
    %s18 = scalar_lea.sflag [#allocation3], 1
    %19 = vsyncpa %s18, 0
    %20 = vsyncpa [#allocation6], 0
    %s21 = scalar_lea.sflag [#allocation6], 1
    %22 = vsyncpa %s21, 0
    %23 = vsyncpa [#allocation9], 0
    %24 = vsyncpa [#allocation12], 0
    %25 = vsyncpa [#allocation15], 0
    %26 = vsyncpa [#allocation4], 0
    %s27 = scalar_lea.sflag [#allocation4], 1
    %28 = vsyncpa %s27, 0
    %29 = vsyncpa [#allocation19], 0
    %s30 = scalar_lea.sflag [#allocation19], 1
    %31 = vsyncpa %s30, 0
    loop: start=0, step=1, limit=4
    $region2: #{tpu_custom_call.1} parent=1 // loop_pre_header
      _
    $region3: #{tpu_custom_call.1} parent=1 // loop_header
      %s33 = sphi 0, %s37
      %p34 = scmp.ge.s32.totalorder %s33, 4
      %s43 = sphi 0, %s45
      %s46 = sphi 0, %s43
      %s47 = sphi 0, %s46
      %s63 = sphi 0, %s47
      %s69 = sphi 0, %s71
      %s72 = sphi 0, %s69
      %s73 = sphi 0, %s72
      %s89 = sphi 0, %s73
      %s95 = sphi 0, %s97
      %s98 = sphi 0, %s95
      %s99 = sphi 0, %s98
      %s115 = sphi 0, %s99
      %s119 = sphi 0, %s119
      %s121 = sphi 0, %s119
      %s122 = sphi 0, %s121
      %s136 = sphi 0, %s122
      %s140 = sphi 0, %s140
      %s142 = sphi 0, %s140
      %s143 = sphi 0, %s142
      %s157 = sphi 0, %s143
      %s161 = sphi 0, %s161
      %s163 = sphi 0, %s161
      %s164 = sphi 0, %s163
      %s178 = sphi 0, %s164
      %s182 = sphi 0, %s182
      %s184 = sphi 0, %s182
      %s185 = sphi 0, %s184
      %s199 = sphi 0, %s185
      %s203 = sphi 0, %s203
      %s205 = sphi 0, %s203
      %s206 = sphi 0, %s205
      %s220 = sphi 0, %s206
      %s224 = sphi 0, %s224
      %s226 = sphi 0, %s224
      %s227 = sphi 0, %s226
      %s241 = sphi 0, %s227
      %s247 = sphi 0, %s249
      %s250 = sphi 0, %s247
      %s251 = sphi 0, %s250
      %s267 = sphi 0, %s251
      %s273 = sphi 0, %s275
      %s276 = sphi 0, %s273
      %s277 = sphi 0, %s276
      %s293 = sphi 0, %s277
      %s299 = sphi 0, %s301
      %s302 = sphi 0, %s299
      %s303 = sphi 0, %s302
      %s319 = sphi 0, %s303
    $region4: #{tpu_custom_call.1} parent=1 // loop_header_branch
      %36 = sbr.rel (%p34) target = $region8
    $region5: #{tpu_custom_call.1} parent=1 // loop_body
      %s38 = ssub.s32 %s33, 1
      %s39 = ssub.s32 %s33, 2
      %s40 = sadd.s32 %s33, 1
      %s41 = ssub.s32 %s33, %s40
      %p42 = scmp.eq.s32.totalorder %s41, 0
      %s44 = sadd.s32 %s43, 1
      %s45 = scalar_select %p42, %s43, %s44
      %p48 = pneg %p42
      %p49 = scmp.eq.s32.totalorder %s33, 1
      %p50 = por %p48, %p49
      %p51 = scmp.ne.s32.totalorder %s43, %s46
      %p52 = scmp.eq.s32.totalorder %s33, 0
      %p53 = por %p51, %p52
      %p54 = scmp.ne.s32.totalorder %s43, %s46
      %p55 = scmp.eq.s32.totalorder %s38, 1
      %p56 = por %p54, %p55
      %p57 = scmp.ne.s32.totalorder %s46, %s47
      %p58 = scmp.eq.s32.totalorder %s38, 0
      %p59 = por %p57, %p58
      %p60 = scmp.ne.s32.totalorder %s46, %s47
      %p61 = scmp.eq.s32.totalorder %s39, 1
      %p62 = por %p60, %p61
      %p64 = scmp.ne.s32.totalorder %s47, %s63
      %p65 = scmp.eq.s32.totalorder %s39, 0
      %p66 = por %p64, %p65
      %s67 = ssub.s32 %s33, %s40
      %p68 = scmp.eq.s32.totalorder %s67, 0
      %s70 = sadd.s32 %s69, 1
      %s71 = scalar_select %p68, %s69, %s70
      %p74 = pneg %p68
      %p75 = scmp.eq.s32.totalorder %s33, 1
      %p76 = por %p74, %p75
      %p77 = scmp.ne.s32.totalorder %s69, %s72
      %p78 = scmp.eq.s32.totalorder %s33, 0
      %p79 = por %p77, %p78
      %p80 = scmp.ne.s32.totalorder %s69, %s72
      %p81 = scmp.eq.s32.totalorder %s38, 1
      %p82 = por %p80, %p81
      %p83 = scmp.ne.s32.totalorder %s72, %s73
      %p84 = scmp.eq.s32.totalorder %s38, 0
      %p85 = por %p83, %p84
      %p86 = scmp.ne.s32.totalorder %s72, %s73
      %p87 = scmp.eq.s32.totalorder %s39, 1
      %p88 = por %p86, %p87
      %p90 = scmp.ne.s32.totalorder %s73, %s89
      %p91 = scmp.eq.s32.totalorder %s39, 0
      %p92 = por %p90, %p91
      %s93 = ssub.s32 %s33, %s40
      %p94 = scmp.eq.s32.totalorder %s93, 0
      %s96 = sadd.s32 %s95, 1
      %s97 = scalar_select %p94, %s95, %s96
      %p100 = pneg %p94
      %p101 = scmp.eq.s32.totalorder %s33, 1
      %p102 = por %p100, %p101
      %p103 = scmp.ne.s32.totalorder %s95, %s98
      %p104 = scmp.eq.s32.totalorder %s33, 0
      %p105 = por %p103, %p104
      %p106 = scmp.ne.s32.totalorder %s95, %s98
      %p107 = scmp.eq.s32.totalorder %s38, 1
      %p108 = por %p106, %p107
      %p109 = scmp.ne.s32.totalorder %s98, %s99
      %p110 = scmp.eq.s32.totalorder %s38, 0
      %p111 = por %p109, %p110
      %p112 = scmp.ne.s32.totalorder %s98, %s99
      %p113 = scmp.eq.s32.totalorder %s39, 1
      %p114 = por %p112, %p113
      %p116 = scmp.ne.s32.totalorder %s99, %s115
      %p117 = scmp.eq.s32.totalorder %s39, 0
      %p118 = por %p116, %p117
      %s120 = sadd.s32 %s119, 1
      %p123 = scmp.eq.s32.totalorder %s33, 1
      %p124 = scmp.ne.s32.totalorder %s119, %s121
      %p125 = scmp.eq.s32.totalorder %s33, 0
      %p126 = por %p124, %p125
      %p127 = scmp.ne.s32.totalorder %s119, %s121
      %p128 = scmp.eq.s32.totalorder %s38, 1
      %p129 = por %p127, %p128
      %p130 = scmp.ne.s32.totalorder %s121, %s122
      %p131 = scmp.eq.s32.totalorder %s38, 0
      %p132 = por %p130, %p131
      %p133 = scmp.ne.s32.totalorder %s121, %s122
      %p134 = scmp.eq.s32.totalorder %s39, 1
      %p135 = por %p133, %p134
      %p137 = scmp.ne.s32.totalorder %s122, %s136
      %p138 = scmp.eq.s32.totalorder %s39, 0
      %p139 = por %p137, %p138
      %s141 = sadd.s32 %s140, 1
      %p144 = scmp.eq.s32.totalorder %s33, 1
      %p145 = scmp.ne.s32.totalorder %s140, %s142
      %p146 = scmp.eq.s32.totalorder %s33, 0
      %p147 = por %p145, %p146
      %p148 = scmp.ne.s32.totalorder %s140, %s142
      %p149 = scmp.eq.s32.totalorder %s38, 1
      %p150 = por %p148, %p149
      %p151 = scmp.ne.s32.totalorder %s142, %s143
      %p152 = scmp.eq.s32.totalorder %s38, 0
      %p153 = por %p151, %p152
      %p154 = scmp.ne.s32.totalorder %s142, %s143
      %p155 = scmp.eq.s32.totalorder %s39, 1
      %p156 = por %p154, %p155
      %p158 = scmp.ne.s32.totalorder %s143, %s157
      %p159 = scmp.eq.s32.totalorder %s39, 0
      %p160 = por %p158, %p159
      %s162 = sadd.s32 %s161, 1
      %p165 = scmp.eq.s32.totalorder %s33, 1
      %p166 = scmp.ne.s32.totalorder %s161, %s163
      %p167 = scmp.eq.s32.totalorder %s33, 0
      %p168 = por %p166, %p167
      %p169 = scmp.ne.s32.totalorder %s161, %s163
      %p170 = scmp.eq.s32.totalorder %s38, 1
      %p171 = por %p169, %p170
      %p172 = scmp.ne.s32.totalorder %s163, %s164
      %p173 = scmp.eq.s32.totalorder %s38, 0
      %p174 = por %p172, %p173
      %p175 = scmp.ne.s32.totalorder %s163, %s164
      %p176 = scmp.eq.s32.totalorder %s39, 1
      %p177 = por %p175, %p176
      %p179 = scmp.ne.s32.totalorder %s164, %s178
      %p180 = scmp.eq.s32.totalorder %s39, 0
      %p181 = por %p179, %p180
      %s183 = sadd.s32 %s182, 1
      %p186 = scmp.eq.s32.totalorder %s33, 1
      %p187 = scmp.ne.s32.totalorder %s182, %s184
      %p188 = scmp.eq.s32.totalorder %s33, 0
      %p189 = por %p187, %p188
      %p190 = scmp.ne.s32.totalorder %s182, %s184
      %p191 = scmp.eq.s32.totalorder %s38, 1
      %p192 = por %p190, %p191
      %p193 = scmp.ne.s32.totalorder %s184, %s185
      %p194 = scmp.eq.s32.totalorder %s38, 0
      %p195 = por %p193, %p194
      %p196 = scmp.ne.s32.totalorder %s184, %s185
      %p197 = scmp.eq.s32.totalorder %s39, 1
      %p198 = por %p196, %p197
      %p200 = scmp.ne.s32.totalorder %s185, %s199
      %p201 = scmp.eq.s32.totalorder %s39, 0
      %p202 = por %p200, %p201
      %s204 = sadd.s32 %s203, 1
      %p207 = scmp.eq.s32.totalorder %s33, 1
      %p208 = scmp.ne.s32.totalorder %s203, %s205
      %p209 = scmp.eq.s32.totalorder %s33, 0
      %p210 = por %p208, %p209
      %p211 = scmp.ne.s32.totalorder %s203, %s205
      %p212 = scmp.eq.s32.totalorder %s38, 1
      %p213 = por %p211, %p212
      %p214 = scmp.ne.s32.totalorder %s205, %s206
      %p215 = scmp.eq.s32.totalorder %s38, 0
      %p216 = por %p214, %p215
      %p217 = scmp.ne.s32.totalorder %s205, %s206
      %p218 = scmp.eq.s32.totalorder %s39, 1
      %p219 = por %p217, %p218
      %p221 = scmp.ne.s32.totalorder %s206, %s220
      %p222 = scmp.eq.s32.totalorder %s39, 0
      %p223 = por %p221, %p222
      %s225 = sadd.s32 %s224, 1
      %p228 = scmp.eq.s32.totalorder %s33, 1
      %p229 = scmp.ne.s32.totalorder %s224, %s226
      %p230 = scmp.eq.s32.totalorder %s33, 0
      %p231 = por %p229, %p230
      %p232 = scmp.ne.s32.totalorder %s224, %s226
      %p233 = scmp.eq.s32.totalorder %s38, 1
      %p234 = por %p232, %p233
      %p235 = scmp.ne.s32.totalorder %s226, %s227
      %p236 = scmp.eq.s32.totalorder %s38, 0
      %p237 = por %p235, %p236
      %p238 = scmp.ne.s32.totalorder %s226, %s227
      %p239 = scmp.eq.s32.totalorder %s39, 1
      %p240 = por %p238, %p239
      %p242 = scmp.ne.s32.totalorder %s227, %s241
      %p243 = scmp.eq.s32.totalorder %s39, 0
      %p244 = por %p242, %p243
      %s245 = ssub.s32 %s33, %s40
      %p246 = scmp.eq.s32.totalorder %s245, 0
      %s248 = sadd.s32 %s247, 1
      %s249 = scalar_select %p246, %s247, %s248
      %p252 = pneg %p246
      %p253 = scmp.eq.s32.totalorder %s33, 1
      %p254 = por %p252, %p253
      %p255 = scmp.ne.s32.totalorder %s247, %s250
      %p256 = scmp.eq.s32.totalorder %s33, 0
      %p257 = por %p255, %p256
      %p258 = scmp.ne.s32.totalorder %s247, %s250
      %p259 = scmp.eq.s32.totalorder %s38, 1
      %p260 = por %p258, %p259
      %p261 = scmp.ne.s32.totalorder %s250, %s251
      %p262 = scmp.eq.s32.totalorder %s38, 0
      %p263 = por %p261, %p262
      %p264 = scmp.ne.s32.totalorder %s250, %s251
      %p265 = scmp.eq.s32.totalorder %s39, 1
      %p266 = por %p264, %p265
      %p268 = scmp.ne.s32.totalorder %s251, %s267
      %p269 = scmp.eq.s32.totalorder %s39, 0
      %p270 = por %p268, %p269
      %s271 = ssub.s32 %s33, %s40
      %p272 = scmp.eq.s32.totalorder %s271, 0
      %s274 = sadd.s32 %s273, 1
      %s275 = scalar_select %p272, %s273, %s274
      %p278 = pneg %p272
      %p279 = scmp.eq.s32.totalorder %s33, 1
      %p280 = por %p278, %p279
      %p281 = scmp.ne.s32.totalorder %s273, %s276
      %p282 = scmp.eq.s32.totalorder %s33, 0
      %p283 = por %p281, %p282
      %p284 = scmp.ne.s32.totalorder %s273, %s276
      %p285 = scmp.eq.s32.totalorder %s38, 1
      %p286 = por %p284, %p285
      %p287 = scmp.ne.s32.totalorder %s276, %s277
      %p288 = scmp.eq.s32.totalorder %s38, 0
      %p289 = por %p287, %p288
      %p290 = scmp.ne.s32.totalorder %s276, %s277
      %p291 = scmp.eq.s32.totalorder %s39, 1
      %p292 = por %p290, %p291
      %p294 = scmp.ne.s32.totalorder %s277, %s293
      %p295 = scmp.eq.s32.totalorder %s39, 0
      %p296 = por %p294, %p295
      %s297 = ssub.s32 %s33, %s40
      %p298 = scmp.eq.s32.totalorder %s297, 0
      %s300 = sadd.s32 %s299, 1
      %s301 = scalar_select %p298, %s299, %s300
      %p304 = pneg %p298
      %p305 = scmp.eq.s32.totalorder %s33, 1
      %p306 = por %p304, %p305
      %p307 = scmp.ne.s32.totalorder %s299, %s302
      %p308 = scmp.eq.s32.totalorder %s33, 0
      %p309 = por %p307, %p308
      %p310 = scmp.ne.s32.totalorder %s299, %s302
      %p311 = scmp.eq.s32.totalorder %s38, 1
      %p312 = por %p310, %p311
      %p313 = scmp.ne.s32.totalorder %s302, %s303
      %p314 = scmp.eq.s32.totalorder %s38, 0
      %p315 = por %p313, %p314
      %p316 = scmp.ne.s32.totalorder %s302, %s303
      %p317 = scmp.eq.s32.totalorder %s39, 1
      %p318 = por %p316, %p317
      %p320 = scmp.ne.s32.totalorder %s303, %s319
      %p321 = scmp.eq.s32.totalorder %s39, 0
      %p322 = por %p320, %p321
      %p323 = scmp.le.s32.totalorder 1, %s33
      %p324 = scmp.lt.s32.totalorder %s33, 3
      %p325 = pnand %p323, %p324
      %p326 = pneg %p325
      // Predicated region
      $region9: #{tpu_custom_call.1} parent=5 // pred_check
        _
      $region10: #{tpu_custom_call.1} parent=5 // pred_check_branch
        %328 = sbr.rel (%p325) target = $region12
      $region11: #{tpu_custom_call.1} parent=5 // pred_region
        %s329 = ssub.s32 %s33, 1
        // Predicated region
        $region13: #{tpu_custom_call.1} parent=11 // pred_check
          %p330 = pneg %p132
        $region14: #{tpu_custom_call.1} parent=11 // pred_check_branch
          %332 = sbr.rel (%p330) target = $region16
        $region15: #{tpu_custom_call.1} parent=11 // pred_region
          %s334 = ssub.s32 512, 512
          %335 = vsyncadd [#allocation9], %s334
          %s336 = sshll.u32 [#allocation8], 4
          %s337 = int_to_ptr.vmem [resolvable:$true] %s336
          %342 = dma.hbm_to_vmem [thread:$0]  %s3, 512, %s337, [#allocation9], 128, 128, 8
        $region16: #{tpu_custom_call.1} parent=11 // pred_fallthru
          _
        // Predicated region
        $region17: #{tpu_custom_call.1} parent=11 // pred_check
          %p343 = pneg %p153
        $region18: #{tpu_custom_call.1} parent=11 // pred_check_branch
          %345 = sbr.rel (%p343) target = $region20
        $region19: #{tpu_custom_call.1} parent=11 // pred_region
          %s347 = ssub.s32 512, 512
          %348 = vsyncadd [#allocation9], %s347
          %s349 = sshll.u32 [#allocation10], 4
          %s350 = int_to_ptr.vmem [resolvable:$true] %s349
          %355 = dma.hbm_to_vmem [thread:$0]  %s4, 512, %s350, [#allocation9], 128, 128, 8
        $region20: #{tpu_custom_call.1} parent=11 // pred_fallthru
          _
        // Predicated region
        $region21: #{tpu_custom_call.1} parent=11 // pred_check
          %p356 = pneg %p174
        $region22: #{tpu_custom_call.1} parent=11 // pred_check_branch
          %358 = sbr.rel (%p356) target = $region24
        $region23: #{tpu_custom_call.1} parent=11 // pred_region
          %s360 = ssub.s32 512, 512
          %361 = vsyncadd [#allocation12], %s360
          %s362 = sshll.u32 [#allocation11], 4
          %s363 = int_to_ptr.vmem [resolvable:$true] %s362
          %368 = dma.hbm_to_vmem [thread:$0]  %s5, 512, %s363, [#allocation12], 128, 128, 8
        $region24: #{tpu_custom_call.1} parent=11 // pred_fallthru
          _
        // Predicated region
        $region25: #{tpu_custom_call.1} parent=11 // pred_check
          %p369 = pneg %p195
        $region26: #{tpu_custom_call.1} parent=11 // pred_check_branch
          %371 = sbr.rel (%p369) target = $region28
        $region27: #{tpu_custom_call.1} parent=11 // pred_region
          %s373 = ssub.s32 16, 16
          %374 = vsyncadd [#allocation12], %s373
          %s376 = sshll.u32 [#allocation13], 4
          %s377 = int_to_ptr.vmem [resolvable:$true] %s376
          %379 = dma.hbm_to_vmem [thread:$0]  %s6, 16, %s377, [#allocation12]
        $region28: #{tpu_custom_call.1} parent=11 // pred_fallthru
          _
        // Predicated region
        $region29: #{tpu_custom_call.1} parent=11 // pred_check
          %p380 = pneg %p216
        $region30: #{tpu_custom_call.1} parent=11 // pred_check_branch
          %382 = sbr.rel (%p380) target = $region32
        $region31: #{tpu_custom_call.1} parent=11 // pred_region
          %s384 = ssub.s32 16, 16
          %385 = vsyncadd [#allocation15], %s384
          %s387 = sshll.u32 [#allocation14], 4
          %s388 = int_to_ptr.vmem [resolvable:$true] %s387
          %390 = dma.hbm_to_vmem [thread:$0]  %s7, 16, %s388, [#allocation15]
        $region32: #{tpu_custom_call.1} parent=11 // pred_fallthru
          _
        // Predicated region
        $region33: #{tpu_custom_call.1} parent=11 // pred_check
          %p391 = pneg %p237
        $region34: #{tpu_custom_call.1} parent=11 // pred_check_branch
          %393 = sbr.rel (%p391) target = $region36
        $region35: #{tpu_custom_call.1} parent=11 // pred_region
          %s395 = ssub.s32 16, 16
          %396 = vsyncadd [#allocation15], %s395
          %s398 = sshll.u32 [#allocation16], 4
          %s399 = int_to_ptr.vmem [resolvable:$true] %s398
          %401 = dma.hbm_to_vmem [thread:$0]  %s8, 16, %s399, [#allocation15]
        $region36: #{tpu_custom_call.1} parent=11 // pred_fallthru
          _
      $region12: #{tpu_custom_call.1} parent=5 // pred_fallthru
        _
      %p402 = scmp.lt.s32.totalorder %s33, 2
      // Predicated region
      $region37: #{tpu_custom_call.1} parent=5 // pred_check
        %p403 = pneg %p402
      $region38: #{tpu_custom_call.1} parent=5 // pred_check_branch
        %405 = sbr.rel (%p403) target = $region40
      $region39: #{tpu_custom_call.1} parent=5 // pred_region
        // Predicated region
        $region41: #{tpu_custom_call.1} parent=39 // pred_check
          %p406 = pneg %p53
        $region42: #{tpu_custom_call.1} parent=39 // pred_check_branch
          %408 = sbr.rel (%p406) target = $region44
        $region43: #{tpu_custom_call.1} parent=39 // pred_region
          %s409 = sand.u32 %s43, 1
          %s410 = scalar_lea.sflag [#allocation3], %s409
          %s411 = sand.u32 %s43, 1
          %s412 = smul.addr %s411, 64
          %s413 = scalar_lea.vmem [#allocation2], %s412
          %s414 = smul.u32 8, %s33
          %s416 = ssub.s32 1024, 1024
          %417 = vsyncadd %s410, %s416
          %s418 = smul.addr %s414, 128
          %s419 = scalar_lea.hbm %s0, %s418
          %s420 = sshll.u32 %s413, 4
          %s421 = int_to_ptr.vmem [resolvable:$true] %s420
          %426 = dma.hbm_to_vmem [thread:$0]  %s419, 1024, %s421, %s410, 128, 128, 8
        $region44: #{tpu_custom_call.1} parent=39 // pred_fallthru
          _
        // Predicated region
        $region45: #{tpu_custom_call.1} parent=39 // pred_check
          %p427 = pneg %p79
        $region46: #{tpu_custom_call.1} parent=39 // pred_check_branch
          %429 = sbr.rel (%p427) target = $region48
        $region47: #{tpu_custom_call.1} parent=39 // pred_region
          %s430 = sand.u32 %s33, 1
          %s431 = scalar_lea.sflag [#allocation6], %s430
          %s432 = sand.u32 %s69, 1
          %s433 = smul.addr %s432, 64
          %s434 = scalar_lea.vmem [#allocation5], %s433
          %s435 = smul.u32 8, %s33
          %s437 = ssub.s32 1024, 1024
          %438 = vsyncadd %s431, %s437
          %s439 = smul.addr %s435, 128
          %s440 = scalar_lea.hbm %s1, %s439
          %s441 = sshll.u32 %s434, 4
          %s442 = int_to_ptr.vmem [resolvable:$true] %s441
          %447 = dma.hbm_to_vmem [thread:$0]  %s440, 1024, %s442, %s431, 128, 128, 8
        $region48: #{tpu_custom_call.1} parent=39 // pred_fallthru
          _
        // Predicated region
        $region49: #{tpu_custom_call.1} parent=39 // pred_check
          %p448 = pneg %p105
        $region50: #{tpu_custom_call.1} parent=39 // pred_check_branch
          %450 = sbr.rel (%p448) target = $region52
        $region51: #{tpu_custom_call.1} parent=39 // pred_region
          %s451 = sand.u32 %s33, 1
          %s452 = scalar_lea.sflag [#allocation6], %s451
          %s453 = sand.u32 %s95, 1
          %s454 = smul.addr %s453, 64
          %s455 = scalar_lea.vmem [#allocation7], %s454
          %s456 = smul.u32 8, %s33
          %s458 = ssub.s32 1024, 1024
          %459 = vsyncadd %s452, %s458
          %s460 = smul.addr %s456, 128
          %s461 = scalar_lea.hbm %s2, %s460
          %s462 = sshll.u32 %s455, 4
          %s463 = int_to_ptr.vmem [resolvable:$true] %s462
          %468 = dma.hbm_to_vmem [thread:$0]  %s461, 1024, %s463, %s452, 128, 128, 8
        $region52: #{tpu_custom_call.1} parent=39 // pred_fallthru
          _
      $region40: #{tpu_custom_call.1} parent=5 // pred_fallthru
        _
      %p469 = scmp.le.s32.totalorder 1, %s33
      %p470 = scmp.lt.s32.totalorder %s33, 3
      %p471 = pnand %p469, %p470
      %p472 = pneg %p471
      // Predicated region
      $region53: #{tpu_custom_call.1} parent=5 // pred_check
        _
      $region54: #{tpu_custom_call.1} parent=5 // pred_check_branch
        %474 = sbr.rel (%p471) target = $region56
      $region55: #{tpu_custom_call.1} parent=5 // pred_region
        %s475 = ssub.s32 %s33, 1
        %s476 = sand.u32 %s46, 1
        %s477 = scalar_lea.sflag [#allocation3], %s476
        %s478 = sand.u32 %s46, 1
        %s479 = smul.addr %s478, 64
        %s480 = scalar_lea.vmem [#allocation2], %s479
        // Predicated region
        $region57: #{tpu_custom_call.1} parent=55 // pred_check
          %p481 = pneg %p59
        $region58: #{tpu_custom_call.1} parent=55 // pred_check_branch
          %483 = sbr.rel (%p481) target = $region60
        $region59: #{tpu_custom_call.1} parent=55 // pred_region
          %484 = dma.done %s477, 1024
        $region60: #{tpu_custom_call.1} parent=55 // pred_fallthru
          _
        %s485 = sand.u32 %s38, 1
        %s486 = scalar_lea.sflag [#allocation6], %s485
        %s487 = sand.u32 %s72, 1
        %s488 = smul.addr %s487, 64
        %s489 = scalar_lea.vmem [#allocation5], %s488
        // Predicated region
        $region61: #{tpu_custom_call.1} parent=55 // pred_check
          %p490 = pneg %p85
        $region62: #{tpu_custom_call.1} parent=55 // pred_check_branch
          %492 = sbr.rel (%p490) target = $region64
        $region63: #{tpu_custom_call.1} parent=55 // pred_region
          %493 = dma.done %s486, 1024
        $region64: #{tpu_custom_call.1} parent=55 // pred_fallthru
          _
        %s494 = sand.u32 %s38, 1
        %s495 = scalar_lea.sflag [#allocation6], %s494
        %s496 = sand.u32 %s98, 1
        %s497 = smul.addr %s496, 64
        %s498 = scalar_lea.vmem [#allocation7], %s497
        // Predicated region
        $region65: #{tpu_custom_call.1} parent=55 // pred_check
          %p499 = pneg %p111
        $region66: #{tpu_custom_call.1} parent=55 // pred_check_branch
          %501 = sbr.rel (%p499) target = $region68
        $region67: #{tpu_custom_call.1} parent=55 // pred_region
          %502 = dma.done %s495, 1024
        $region68: #{tpu_custom_call.1} parent=55 // pred_fallthru
          _
        // Predicated region
        $region69: #{tpu_custom_call.1} parent=55 // pred_check
          %p503 = pneg %p132
        $region70: #{tpu_custom_call.1} parent=55 // pred_check_branch
          %505 = sbr.rel (%p503) target = $region72
        $region71: #{tpu_custom_call.1} parent=55 // pred_region
          %506 = dma.done [#allocation9], 512
        $region72: #{tpu_custom_call.1} parent=55 // pred_fallthru
          _
        // Predicated region
        $region73: #{tpu_custom_call.1} parent=55 // pred_check
          %p507 = pneg %p153
        $region74: #{tpu_custom_call.1} parent=55 // pred_check_branch
          %509 = sbr.rel (%p507) target = $region76
        $region75: #{tpu_custom_call.1} parent=55 // pred_region
          %510 = dma.done [#allocation9], 512
        $region76: #{tpu_custom_call.1} parent=55 // pred_fallthru
          _
        // Predicated region
        $region77: #{tpu_custom_call.1} parent=55 // pred_check
          %p511 = pneg %p174
        $region78: #{tpu_custom_call.1} parent=55 // pred_check_branch
          %513 = sbr.rel (%p511) target = $region80
        $region79: #{tpu_custom_call.1} parent=55 // pred_region
          %514 = dma.done [#allocation12], 512
        $region80: #{tpu_custom_call.1} parent=55 // pred_fallthru
          _
        // Predicated region
        $region81: #{tpu_custom_call.1} parent=55 // pred_check
          %p515 = pneg %p195
        $region82: #{tpu_custom_call.1} parent=55 // pred_check_branch
          %517 = sbr.rel (%p515) target = $region84
        $region83: #{tpu_custom_call.1} parent=55 // pred_region
          %518 = dma.done [#allocation12], 16
        $region84: #{tpu_custom_call.1} parent=55 // pred_fallthru
          _
        // Predicated region
        $region85: #{tpu_custom_call.1} parent=55 // pred_check
          %p519 = pneg %p216
        $region86: #{tpu_custom_call.1} parent=55 // pred_check_branch
          %521 = sbr.rel (%p519) target = $region88
        $region87: #{tpu_custom_call.1} parent=55 // pred_region
          %522 = dma.done [#allocation15], 16
        $region88: #{tpu_custom_call.1} parent=55 // pred_fallthru
          _
        // Predicated region
        $region89: #{tpu_custom_call.1} parent=55 // pred_check
          %p523 = pneg %p237
        $region90: #{tpu_custom_call.1} parent=55 // pred_check_branch
          %525 = sbr.rel (%p523) target = $region92
        $region91: #{tpu_custom_call.1} parent=55 // pred_region
          %526 = dma.done [#allocation15], 16
        $region92: #{tpu_custom_call.1} parent=55 // pred_fallthru
          _
        %s527 = sand.u32 %s46, 1
        %s528 = scalar_lea.sflag [#allocation3], %s527
        %s529 = sand.u32 %s46, 1
        %s530 = smul.addr %s529, 64
        %s531 = scalar_lea.vmem [#allocation2], %s530
        %p532 = pneg %p59
        %p533 = pneg %p56
        %s534 = sand.u32 %s38, 1
        %s535 = scalar_lea.sflag [#allocation6], %s534
        %s536 = sand.u32 %s72, 1
        %s537 = smul.addr %s536, 64
        %s538 = scalar_lea.vmem [#allocation5], %s537
        %p539 = pneg %p85
        %p540 = pneg %p82
        %s541 = sand.u32 %s38, 1
        %s542 = scalar_lea.sflag [#allocation6], %s541
        %s543 = sand.u32 %s98, 1
        %s544 = smul.addr %s543, 64
        %s545 = scalar_lea.vmem [#allocation7], %s544
        %p546 = pneg %p111
        %p547 = pneg %p108
        %p548 = pneg %p132
        %p549 = pneg %p129
        %p550 = pneg %p153
        %p551 = pneg %p150
        %p552 = pneg %p174
        %p553 = pneg %p171
        %p554 = pneg %p195
        %p555 = pneg %p192
        %p556 = pneg %p216
        %p557 = pneg %p213
        %p558 = pneg %p237
        %p559 = pneg %p234
        %p560 = pneg %p263
        %p561 = pneg %p260
        %s562 = sand.u32 %s250, 1
        %s563 = scalar_lea.sflag [#allocation4], %s562
        %s564 = sand.u32 %s250, 1
        %s565 = smul.addr %s564, 64
        %s566 = scalar_lea.vmem [#allocation17], %s565
        %p567 = pneg %p289
        %p568 = pneg %p286
        %s569 = sand.u32 %s38, 1
        %s570 = scalar_lea.sflag [#allocation19], %s569
        %s571 = sand.u32 %s276, 1
        %s572 = smul.addr %s571, 64
        %s573 = scalar_lea.vmem [#allocation18], %s572
        %p574 = pneg %p315
        %p575 = pneg %p312
        %s576 = sand.u32 %s38, 1
        %s577 = scalar_lea.sflag [#allocation19], %s576
        %s578 = sand.u32 %s302, 1
        %s579 = smul.addr %s578, 64
        %s580 = scalar_lea.vmem [#allocation20], %s579
        %s581 = smul.u32 8, %s38
        %s582 = smul.u32 8, %s38
        %s583 = smul.u32 8, %s38
        %s584 = smul.u32 8, %s38
        %s585 = smul.u32 8, %s38
        %s586 = smul.u32 8, %s38
        %v587 = vld [vmem:[%s480] sm:$0xff]
        %v588 = vld [vmem:[%s480 + $0x8] sm:$0xff]
        %v589 = vld [vmem:[%s480 + $0x10] sm:$0xff]
        %v590 = vld [vmem:[%s480 + $0x18] sm:$0xff]
        %v591 = vld [vmem:[%s480 + $0x20] sm:$0xff]
        %v592 = vld [vmem:[%s480 + $0x28] sm:$0xff]
        %v593 = vld [vmem:[%s480 + $0x30] sm:$0xff]
        %v594 = vld [vmem:[%s480 + $0x38] sm:$0xff]
        %v595 = vld [vmem:[#allocation8] sm:$0xff]
        %v596 = vld [vmem:[#allocation8 + $0x8] sm:$0xff]
        %v597 = vld [vmem:[#allocation8 + $0x10] sm:$0xff]
        %v598 = vld [vmem:[#allocation8 + $0x18] sm:$0xff]
        %v599 = vld [vmem:[#allocation13] sm:$0x1]
        %v601 = vlaneseq
        %v602 = vshrl.u32 %v601, 7
        %v603 = vsub.s32 0, %v602
        %v604 = vrot.slane %v599, %v603
        %vm606 = vcmask 261120
        %v608 = vsel %vm606, %v587, 0
        %v611 = vsel %vm606, %v588, 0
        %v614 = vsel %vm606, %v589, 0
        %v617 = vsel %vm606, %v590, 0
        %v620 = vsel %vm606, %v591, 0
        %v623 = vsel %vm606, %v592, 0
        %v626 = vsel %vm606, %v593, 0
        %v629 = vsel %vm606, %v594, 0
        %631 = vmatprep.subr.mxu0 0.0
        %632 = vmatpush1.msra.mxu0 %v595
        %633 = vmatprep.subr.mxu0 0.0
        %634 = vmatpush1.msra.mxu0 %v596
        %635 = vmatprep.subr.mxu0 0.0
        %636 = vmatpush1.msra.mxu0 %v597
        %637 = vmatprep.subr.mxu0 0.0
        %638 = vmatpush1.msra.mxu0 %v598
        %639 = vmatprep.subr.mxu0 0.0
        %640 = vmatpush1.msra.mxu0 0.0
        %641 = vmatprep.subr.mxu0 0.0
        %642 = vmatpush1.msra.mxu0 0.0
        %643 = vmatprep.subr.mxu0 0.0
        %644 = vmatpush1.msra.mxu0 0.0
        %645 = vmatprep.subr.mxu0 0.0
        %646 = vmatpush1.msra.mxu0 0.0
        %647 = vmatprep.subr.mxu0 0.0
        %648 = vmatpush1.msra.mxu0 0.0
        %649 = vmatprep.subr.mxu0 0.0
        %650 = vmatpush1.msra.mxu0 0.0
        %651 = vmatprep.subr.mxu0 0.0
        %652 = vmatpush1.msra.mxu0 0.0
        %653 = vmatprep.subr.mxu0 0.0
        %654 = vmatpush1.msra.mxu0 0.0
        %655 = vmatprep.subr.mxu0 0.0
        %656 = vmatpush1.msra.mxu0 0.0
        %657 = vmatprep.subr.mxu0 0.0
        %658 = vmatpush1.msra.mxu0 0.0
        %659 = vmatprep.subr.mxu0 0.0
        %660 = vmatpush1.msra.mxu0 0.0
        %661 = vmatprep.subr.mxu0 0.0
        %662 = vmatpush1.msra.mxu0 0.0
        %663 = vmatprep.subr.mxu0 0.0
        %664 = vmatpush1.msra.mxu0 0.0
        %665 = vmatprep.subr.mxu0 0.0
        %666 = vmatpush1.msra.mxu0 0.0
        %667 = vmatprep.subr.mxu0 0.0
        %668 = vmatpush1.msra.mxu0 0.0
        %669 = vmatprep.subr.mxu0 0.0
        %670 = vmatpush1.msra.mxu0 0.0
        %671 = vmatprep.subr.mxu0 0.0
        %672 = vmatpush1.msra.mxu0 0.0
        %673 = vmatprep.subr.mxu0 0.0
        %674 = vmatpush1.msra.mxu0 0.0
        %675 = vmatprep.subr.mxu0 0.0
        %676 = vmatpush1.msra.mxu0 0.0
        %677 = vmatprep.subr.mxu0 0.0
        %678 = vmatpush1.msra.mxu0 0.0
        %679 = vmatprep.subr.mxu0 0.0
        %680 = vmatpush1.msra.mxu0 0.0
        %681 = vmatprep.subr.mxu0 0.0
        %682 = vmatpush1.msra.mxu0 0.0
        %683 = vmatprep.subr.mxu0 0.0
        %684 = vmatpush1.msra.mxu0 0.0
        %685 = vmatprep.subr.mxu0 0.0
        %686 = vmatpush1.msra.mxu0 0.0
        %687 = vmatprep.subr.mxu0 0.0
        %688 = vmatpush1.msra.mxu0 0.0
        %689 = vmatprep.subr.mxu0 0.0
        %690 = vmatpush1.msra.mxu0 0.0
        %691 = vmatprep.subr.mxu0 0.0
        %692 = vmatpush1.msra.mxu0 0.0
        %693 = vmatprep.subr.mxu0 0.0
        %694 = vmatpush1.msra.mxu0 0.0
        %695 = vmatprep.mubr.f32.mxu0 0.0
        %696 = vmatmul.mubr.f32.gmra.mrb[0].mxu0 %v608
        %v697 = vpop.f32.mrb[0].mxu0
        %v698 = vadd.f32 %v604, %v697
        %v699 = vpop.f32.mrb[0].mxu0
        %700 = vmatprep.mubr.f32.mxu0 0.0
        %701 = vmatmul.mubr.f32.gmra.mrb[0].mxu0 %v611
        %v702 = vpop.f32.mrb[0].mxu0
        %v703 = vadd.f32 %v604, %v702
        %v704 = vpop.f32.mrb[0].mxu0
        %705 = vmatprep.mubr.f32.mxu0 0.0
        %706 = vmatmul.mubr.f32.gmra.mrb[0].mxu0 %v614
        %v707 = vpop.f32.mrb[0].mxu0
        %v708 = vadd.f32 %v604, %v707
        %v709 = vpop.f32.mrb[0].mxu0
        %710 = vmatprep.mubr.f32.mxu0 0.0
        %711 = vmatmul.mubr.f32.gmra.mrb[0].mxu0 %v617
        %v712 = vpop.f32.mrb[0].mxu0
        %v713 = vadd.f32 %v604, %v712
        %v714 = vpop.f32.mrb[0].mxu0
        %715 = vmatprep.mubr.f32.mxu0 0.0
        %716 = vmatmul.mubr.f32.gmra.mrb[0].mxu0 %v620
        %v717 = vpop.f32.mrb[0].mxu0
        %v718 = vadd.f32 %v604, %v717
        %v719 = vpop.f32.mrb[0].mxu0
        %720 = vmatprep.mubr.f32.mxu0 0.0
        %721 = vmatmul.mubr.f32.gmra.mrb[0].mxu0 %v623
        %v722 = vpop.f32.mrb[0].mxu0
        %v723 = vadd.f32 %v604, %v722
        %v724 = vpop.f32.mrb[0].mxu0
        %725 = vmatprep.mubr.f32.mxu0 0.0
        %726 = vmatmul.mubr.f32.gmra.mrb[0].mxu0 %v626
        %v727 = vpop.f32.mrb[0].mxu0
        %v728 = vadd.f32 %v604, %v727
        %v729 = vpop.f32.mrb[0].mxu0
        %730 = vmatprep.mubr.f32.mxu0 0.0
        %731 = vmatmul.mubr.f32.gmra.mrb[0].mxu0 %v629
        %v732 = vpop.f32.mrb[0].mxu0
        %v733 = vadd.f32 %v604, %v732
        %v734 = vpop.f32.mrb[0].mxu0
        %735 = vdwg.mxu0
        %736 = vst.msk [vmem:[%s566] sm:$0xff] %vm606, %v698
        %737 = vst.msk [vmem:[%s566 + $0x8] sm:$0xff] %vm606, %v703
        %738 = vst.msk [vmem:[%s566 + $0x10] sm:$0xff] %vm606, %v708
        %739 = vst.msk [vmem:[%s566 + $0x18] sm:$0xff] %vm606, %v713
        %740 = vst.msk [vmem:[%s566 + $0x20] sm:$0xff] %vm606, %v718
        %741 = vst.msk [vmem:[%s566 + $0x28] sm:$0xff] %vm606, %v723
        %742 = vst.msk [vmem:[%s566 + $0x30] sm:$0xff] %vm606, %v728
        %743 = vst.msk [vmem:[%s566 + $0x38] sm:$0xff] %vm606, %v733
        %v744 = vld [vmem:[%s489] sm:$0xff]
        %v745 = vld [vmem:[%s489 + $0x8] sm:$0xff]
        %v746 = vld [vmem:[%s489 + $0x10] sm:$0xff]
        %v747 = vld [vmem:[%s489 + $0x18] sm:$0xff]
        %v748 = vld [vmem:[%s489 + $0x20] sm:$0xff]
        %v749 = vld [vmem:[%s489 + $0x28] sm:$0xff]
        %v750 = vld [vmem:[%s489 + $0x30] sm:$0xff]
        %v751 = vld [vmem:[%s489 + $0x38] sm:$0xff]
        %v752 = vld [vmem:[#allocation10] sm:$0xff]
        %v753 = vld [vmem:[#allocation10 + $0x8] sm:$0xff]
        %v754 = vld [vmem:[#allocation10 + $0x10] sm:$0xff]
        %v755 = vld [vmem:[#allocation10 + $0x18] sm:$0xff]
        %v756 = vld [vmem:[#allocation14] sm:$0x1]
        %v758 = vlaneseq
        %v759 = vshrl.u32 %v758, 7
        %v760 = vsub.s32 0, %v759
        %v761 = vrot.slane %v756, %v760
        %v764 = vsel %vm606, %v744, 0
        %v767 = vsel %vm606, %v745, 0
        %v770 = vsel %vm606, %v746, 0
        %v773 = vsel %vm606, %v747, 0
        %v776 = vsel %vm606, %v748, 0
        %v779 = vsel %vm606, %v749, 0
        %v782 = vsel %vm606, %v750, 0
        %v785 = vsel %vm606, %v751, 0
        %787 = vmatprep.subr.mxu0 0.0
        %788 = vmatpush1.msra.mxu0 %v752
        %789 = vmatprep.subr.mxu0 0.0
        %790 = vmatpush1.msra.mxu0 %v753
        %791 = vmatprep.subr.mxu0 0.0
        %792 = vmatpush1.msra.mxu0 %v754
        %793 = vmatprep.subr.mxu0 0.0
        %794 = vmatpush1.msra.mxu0 %v755
        %795 = vmatprep.subr.mxu0 0.0
        %796 = vmatpush1.msra.mxu0 0.0
        %797 = vmatprep.subr.mxu0 0.0
        %798 = vmatpush1.msra.mxu0 0.0
        %799 = vmatprep.subr.mxu0 0.0
        %800 = vmatpush1.msra.mxu0 0.0
        %801 = vmatprep.subr.mxu0 0.0
        %802 = vmatpush1.msra.mxu0 0.0
        %803 = vmatprep.subr.mxu0 0.0
        %804 = vmatpush1.msra.mxu0 0.0
        %805 = vmatprep.subr.mxu0 0.0
        %806 = vmatpush1.msra.mxu0 0.0
        %807 = vmatprep.subr.mxu0 0.0
        %808 = vmatpush1.msra.mxu0 0.0
        %809 = vmatprep.subr.mxu0 0.0
        %810 = vmatpush1.msra.mxu0 0.0
        %811 = vmatprep.subr.mxu0 0.0
        %812 = vmatpush1.msra.mxu0 0.0
        %813 = vmatprep.subr.mxu0 0.0
        %814 = vmatpush1.msra.mxu0 0.0
        %815 = vmatprep.subr.mxu0 0.0
        %816 = vmatpush1.msra.mxu0 0.0
        %817 = vmatprep.subr.mxu0 0.0
        %818 = vmatpush1.msra.mxu0 0.0
        %819 = vmatprep.subr.mxu0 0.0
        %820 = vmatpush1.msra.mxu0 0.0
        %821 = vmatprep.subr.mxu0 0.0
        %822 = vmatpush1.msra.mxu0 0.0
        %823 = vmatprep.subr.mxu0 0.0
        %824 = vmatpush1.msra.mxu0 0.0
        %825 = vmatprep.subr.mxu0 0.0
        %826 = vmatpush1.msra.mxu0 0.0
        %827 = vmatprep.subr.mxu0 0.0
        %828 = vmatpush1.msra.mxu0 0.0
        %829 = vmatprep.subr.mxu0 0.0
        %830 = vmatpush1.msra.mxu0 0.0
        %831 = vmatprep.subr.mxu0 0.0
        %832 = vmatpush1.msra.mxu0 0.0
        %833 = vmatprep.subr.mxu0 0.0
        %834 = vmatpush1.msra.mxu0 0.0
        %835 = vmatprep.subr.mxu0 0.0
        %836 = vmatpush1.msra.mxu0 0.0
        %837 = vmatprep.subr.mxu0 0.0
        %838 = vmatpush1.msra.mxu0 0.0
        %839 = vmatprep.subr.mxu0 0.0
        %840 = vmatpush1.msra.mxu0 0.0
        %841 = vmatprep.subr.mxu0 0.0
        %842 = vmatpush1.msra.mxu0 0.0
        %843 = vmatprep.subr.mxu0 0.0
        %844 = vmatpush1.msra.mxu0 0.0
        %845 = vmatprep.subr.mxu0 0.0
        %846 = vmatpush1.msra.mxu0 0.0
        %847 = vmatprep.subr.mxu0 0.0
        %848 = vmatpush1.msra.mxu0 0.0
        %849 = vmatprep.subr.mxu0 0.0
        %850 = vmatpush1.msra.mxu0 0.0
        %851 = vmatprep.mubr.f32.mxu0 0.0
        %852 = vmatmul.mubr.f32.gmra.mrb[0].mxu0 %v764
        %v853 = vpop.f32.mrb[0].mxu0
        %v854 = vadd.f32 %v761, %v853
        %v855 = vpop.f32.mrb[0].mxu0
        %856 = vmatprep.mubr.f32.mxu0 0.0
        %857 = vmatmul.mubr.f32.gmra.mrb[0].mxu0 %v767
        %v858 = vpop.f32.mrb[0].mxu0
        %v859 = vadd.f32 %v761, %v858
        %v860 = vpop.f32.mrb[0].mxu0
        %861 = vmatprep.mubr.f32.mxu0 0.0
        %862 = vmatmul.mubr.f32.gmra.mrb[0].mxu0 %v770
        %v863 = vpop.f32.mrb[0].mxu0
        %v864 = vadd.f32 %v761, %v863
        %v865 = vpop.f32.mrb[0].mxu0
        %866 = vmatprep.mubr.f32.mxu0 0.0
        %867 = vmatmul.mubr.f32.gmra.mrb[0].mxu0 %v773
        %v868 = vpop.f32.mrb[0].mxu0
        %v869 = vadd.f32 %v761, %v868
        %v870 = vpop.f32.mrb[0].mxu0
        %871 = vmatprep.mubr.f32.mxu0 0.0
        %872 = vmatmul.mubr.f32.gmra.mrb[0].mxu0 %v776
        %v873 = vpop.f32.mrb[0].mxu0
        %v874 = vadd.f32 %v761, %v873
        %v875 = vpop.f32.mrb[0].mxu0
        %876 = vmatprep.mubr.f32.mxu0 0.0
        %877 = vmatmul.mubr.f32.gmra.mrb[0].mxu0 %v779
        %v878 = vpop.f32.mrb[0].mxu0
        %v879 = vadd.f32 %v761, %v878
        %v880 = vpop.f32.mrb[0].mxu0
        %881 = vmatprep.mubr.f32.mxu0 0.0
        %882 = vmatmul.mubr.f32.gmra.mrb[0].mxu0 %v782
        %v883 = vpop.f32.mrb[0].mxu0
        %v884 = vadd.f32 %v761, %v883
        %v885 = vpop.f32.mrb[0].mxu0
        %886 = vmatprep.mubr.f32.mxu0 0.0
        %887 = vmatmul.mubr.f32.gmra.mrb[0].mxu0 %v785
        %v888 = vpop.f32.mrb[0].mxu0
        %v889 = vadd.f32 %v761, %v888
        %v890 = vpop.f32.mrb[0].mxu0
        %891 = vdwg.mxu0
        %892 = vst.msk [vmem:[%s573] sm:$0xff] %vm606, %v854
        %893 = vst.msk [vmem:[%s573 + $0x8] sm:$0xff] %vm606, %v859
        %894 = vst.msk [vmem:[%s573 + $0x10] sm:$0xff] %vm606, %v864
        %895 = vst.msk [vmem:[%s573 + $0x18] sm:$0xff] %vm606, %v869
        %896 = vst.msk [vmem:[%s573 + $0x20] sm:$0xff] %vm606, %v874
        %897 = vst.msk [vmem:[%s573 + $0x28] sm:$0xff] %vm606, %v879
        %898 = vst.msk [vmem:[%s573 + $0x30] sm:$0xff] %vm606, %v884
        %899 = vst.msk [vmem:[%s573 + $0x38] sm:$0xff] %vm606, %v889
        %v900 = vld [vmem:[%s498] sm:$0xff]
        %v901 = vld [vmem:[%s498 + $0x8] sm:$0xff]
        %v902 = vld [vmem:[%s498 + $0x10] sm:$0xff]
        %v903 = vld [vmem:[%s498 + $0x18] sm:$0xff]
        %v904 = vld [vmem:[%s498 + $0x20] sm:$0xff]
        %v905 = vld [vmem:[%s498 + $0x28] sm:$0xff]
        %v906 = vld [vmem:[%s498 + $0x30] sm:$0xff]
        %v907 = vld [vmem:[%s498 + $0x38] sm:$0xff]
        %v908 = vld [vmem:[#allocation11] sm:$0xff]
        %v909 = vld [vmem:[#allocation11 + $0x8] sm:$0xff]
        %v910 = vld [vmem:[#allocation11 + $0x10] sm:$0xff]
        %v911 = vld [vmem:[#allocation11 + $0x18] sm:$0xff]
        %v912 = vld [vmem:[#allocation16] sm:$0x1]
        %v914 = vlaneseq
        %v915 = vshrl.u32 %v914, 7
        %v916 = vsub.s32 0, %v915
        %v917 = vrot.slane %v912, %v916
        %v920 = vsel %vm606, %v900, 0
        %v923 = vsel %vm606, %v901, 0
        %v926 = vsel %vm606, %v902, 0
        %v929 = vsel %vm606, %v903, 0
        %v932 = vsel %vm606, %v904, 0
        %v935 = vsel %vm606, %v905, 0
        %v938 = vsel %vm606, %v906, 0
        %v941 = vsel %vm606, %v907, 0
        %943 = vmatprep.subr.mxu0 0.0
        %944 = vmatpush1.msra.mxu0 %v908
        %945 = vmatprep.subr.mxu0 0.0
        %946 = vmatpush1.msra.mxu0 %v909
        %947 = vmatprep.subr.mxu0 0.0
        %948 = vmatpush1.msra.mxu0 %v910
        %949 = vmatprep.subr.mxu0 0.0
        %950 = vmatpush1.msra.mxu0 %v911
        %951 = vmatprep.subr.mxu0 0.0
        %952 = vmatpush1.msra.mxu0 0.0
        %953 = vmatprep.subr.mxu0 0.0
        %954 = vmatpush1.msra.mxu0 0.0
        %955 = vmatprep.subr.mxu0 0.0
        %956 = vmatpush1.msra.mxu0 0.0
        %957 = vmatprep.subr.mxu0 0.0
        %958 = vmatpush1.msra.mxu0 0.0
        %959 = vmatprep.subr.mxu0 0.0
        %960 = vmatpush1.msra.mxu0 0.0
        %961 = vmatprep.subr.mxu0 0.0
        %962 = vmatpush1.msra.mxu0 0.0
        %963 = vmatprep.subr.mxu0 0.0
        %964 = vmatpush1.msra.mxu0 0.0
        %965 = vmatprep.subr.mxu0 0.0
        %966 = vmatpush1.msra.mxu0 0.0
        %967 = vmatprep.subr.mxu0 0.0
        %968 = vmatpush1.msra.mxu0 0.0
        %969 = vmatprep.subr.mxu0 0.0
        %970 = vmatpush1.msra.mxu0 0.0
        %971 = vmatprep.subr.mxu0 0.0
        %972 = vmatpush1.msra.mxu0 0.0
        %973 = vmatprep.subr.mxu0 0.0
        %974 = vmatpush1.msra.mxu0 0.0
        %975 = vmatprep.subr.mxu0 0.0
        %976 = vmatpush1.msra.mxu0 0.0
        %977 = vmatprep.subr.mxu0 0.0
        %978 = vmatpush1.msra.mxu0 0.0
        %979 = vmatprep.subr.mxu0 0.0
        %980 = vmatpush1.msra.mxu0 0.0
        %981 = vmatprep.subr.mxu0 0.0
        %982 = vmatpush1.msra.mxu0 0.0
        %983 = vmatprep.subr.mxu0 0.0
        %984 = vmatpush1.msra.mxu0 0.0
        %985 = vmatprep.subr.mxu0 0.0
        %986 = vmatpush1.msra.mxu0 0.0
        %987 = vmatprep.subr.mxu0 0.0
        %988 = vmatpush1.msra.mxu0 0.0
        %989 = vmatprep.subr.mxu0 0.0
        %990 = vmatpush1.msra.mxu0 0.0
        %991 = vmatprep.subr.mxu0 0.0
        %992 = vmatpush1.msra.mxu0 0.0
        %993 = vmatprep.subr.mxu0 0.0
        %994 = vmatpush1.msra.mxu0 0.0
        %995 = vmatprep.subr.mxu0 0.0
        %996 = vmatpush1.msra.mxu0 0.0
        %997 = vmatprep.subr.mxu0 0.0
        %998 = vmatpush1.msra.mxu0 0.0
        %999 = vmatprep.subr.mxu0 0.0
        %1000 = vmatpush1.msra.mxu0 0.0
        %1001 = vmatprep.subr.mxu0 0.0
        %1002 = vmatpush1.msra.mxu0 0.0
        %1003 = vmatprep.subr.mxu0 0.0
        %1004 = vmatpush1.msra.mxu0 0.0
        %1005 = vmatprep.subr.mxu0 0.0
        %1006 = vmatpush1.msra.mxu0 0.0
        %1007 = vmatprep.mubr.f32.mxu0 0.0
        %1008 = vmatmul.mubr.f32.gmra.mrb[0].mxu0 %v920
        %v1009 = vpop.f32.mrb[0].mxu0
        %v1010 = vadd.f32 %v917, %v1009
        %v1011 = vpop.f32.mrb[0].mxu0
        %1012 = vmatprep.mubr.f32.mxu0 0.0
        %1013 = vmatmul.mubr.f32.gmra.mrb[0].mxu0 %v923
        %v1014 = vpop.f32.mrb[0].mxu0
        %v1015 = vadd.f32 %v917, %v1014
        %v1016 = vpop.f32.mrb[0].mxu0
        %1017 = vmatprep.mubr.f32.mxu0 0.0
        %1018 = vmatmul.mubr.f32.gmra.mrb[0].mxu0 %v926
        %v1019 = vpop.f32.mrb[0].mxu0
        %v1020 = vadd.f32 %v917, %v1019
        %v1021 = vpop.f32.mrb[0].mxu0
        %1022 = vmatprep.mubr.f32.mxu0 0.0
        %1023 = vmatmul.mubr.f32.gmra.mrb[0].mxu0 %v929
        %v1024 = vpop.f32.mrb[0].mxu0
        %v1025 = vadd.f32 %v917, %v1024
        %v1026 = vpop.f32.mrb[0].mxu0
        %1027 = vmatprep.mubr.f32.mxu0 0.0
        %1028 = vmatmul.mubr.f32.gmra.mrb[0].mxu0 %v932
        %v1029 = vpop.f32.mrb[0].mxu0
        %v1030 = vadd.f32 %v917, %v1029
        %v1031 = vpop.f32.mrb[0].mxu0
        %1032 = vmatprep.mubr.f32.mxu0 0.0
        %1033 = vmatmul.mubr.f32.gmra.mrb[0].mxu0 %v935
        %v1034 = vpop.f32.mrb[0].mxu0
        %v1035 = vadd.f32 %v917, %v1034
        %v1036 = vpop.f32.mrb[0].mxu0
        %1037 = vmatprep.mubr.f32.mxu0 0.0
        %1038 = vmatmul.mubr.f32.gmra.mrb[0].mxu0 %v938
        %v1039 = vpop.f32.mrb[0].mxu0
        %v1040 = vadd.f32 %v917, %v1039
        %v1041 = vpop.f32.mrb[0].mxu0
        %1042 = vmatprep.mubr.f32.mxu0 0.0
        %1043 = vmatmul.mubr.f32.gmra.mrb[0].mxu0 %v941
        %v1044 = vpop.f32.mrb[0].mxu0
        %v1045 = vadd.f32 %v917, %v1044
        %v1046 = vpop.f32.mrb[0].mxu0
        %1047 = vdwg.mxu0
        %1048 = vst.msk [vmem:[%s580] sm:$0xff] %vm606, %v1010
        %1049 = vst.msk [vmem:[%s580 + $0x8] sm:$0xff] %vm606, %v1015
        %1050 = vst.msk [vmem:[%s580 + $0x10] sm:$0xff] %vm606, %v1020
        %1051 = vst.msk [vmem:[%s580 + $0x18] sm:$0xff] %vm606, %v1025
        %1052 = vst.msk [vmem:[%s580 + $0x20] sm:$0xff] %vm606, %v1030
        %1053 = vst.msk [vmem:[%s580 + $0x28] sm:$0xff] %vm606, %v1035
        %1054 = vst.msk [vmem:[%s580 + $0x30] sm:$0xff] %vm606, %v1040
        %1055 = vst.msk [vmem:[%s580 + $0x38] sm:$0xff] %vm606, %v1045
        %s1056 = sand.u32 %s250, 1
        %s1057 = scalar_lea.sflag [#allocation4], %s1056
        %s1058 = sand.u32 %s250, 1
        %s1059 = smul.addr %s1058, 64
        %s1060 = scalar_lea.vmem [#allocation17], %s1059
        %s1061 = sand.u32 %s38, 1
        %s1062 = scalar_lea.sflag [#allocation19], %s1061
        %s1063 = sand.u32 %s276, 1
        %s1064 = smul.addr %s1063, 64
        %s1065 = scalar_lea.vmem [#allocation18], %s1064
        %s1066 = sand.u32 %s38, 1
        %s1067 = scalar_lea.sflag [#allocation19], %s1066
        %s1068 = sand.u32 %s302, 1
        %s1069 = smul.addr %s1068, 64
        %s1070 = scalar_lea.vmem [#allocation20], %s1069
        // Predicated region
        $region93: #{tpu_custom_call.1} parent=55 // pred_check
          %p1071 = pneg %p260
        $region94: #{tpu_custom_call.1} parent=55 // pred_check_branch
          %1073 = sbr.rel (%p1071) target = $region96
        $region95: #{tpu_custom_call.1} parent=55 // pred_region
          %s1074 = smul.u32 8, %s38
          %s1076 = ssub.s32 1024, 1024
          %1077 = vsyncadd %s1057, %s1076
          %s1078 = smul.addr %s1074, 128
          %s1079 = scalar_lea.hbm %s9, %s1078
          %s1080 = sshll.u32 %s1060, 4
          %s1081 = int_to_ptr.vmem [resolvable:$true] %s1080
          %1086 = dma.vmem_to_hbm [thread:$0]  %s1081, 1024, %s1079, %s1057, 128, 128, 8
        $region96: #{tpu_custom_call.1} parent=55 // pred_fallthru
          _
        // Predicated region
        $region97: #{tpu_custom_call.1} parent=55 // pred_check
          %p1087 = pneg %p286
        $region98: #{tpu_custom_call.1} parent=55 // pred_check_branch
          %1089 = sbr.rel (%p1087) target = $region100
        $region99: #{tpu_custom_call.1} parent=55 // pred_region
          %s1090 = smul.u32 8, %s38
          %s1092 = ssub.s32 1024, 1024
          %1093 = vsyncadd %s1062, %s1092
          %s1094 = smul.addr %s1090, 128
          %s1095 = scalar_lea.hbm %s10, %s1094
          %s1096 = sshll.u32 %s1065, 4
          %s1097 = int_to_ptr.vmem [resolvable:$true] %s1096
          %1102 = dma.vmem_to_hbm [thread:$0]  %s1097, 1024, %s1095, %s1062, 128, 128, 8
        $region100: #{tpu_custom_call.1} parent=55 // pred_fallthru
          _
        // Predicated region
        $region101: #{tpu_custom_call.1} parent=55 // pred_check
          %p1103 = pneg %p312
        $region102: #{tpu_custom_call.1} parent=55 // pred_check_branch
          %1105 = sbr.rel (%p1103) target = $region104
        $region103: #{tpu_custom_call.1} parent=55 // pred_region
          %s1106 = smul.u32 8, %s38
          %s1108 = ssub.s32 1024, 1024
          %1109 = vsyncadd %s1067, %s1108
          %s1110 = smul.addr %s1106, 128
          %s1111 = scalar_lea.hbm %s11, %s1110
          %s1112 = sshll.u32 %s1070, 4
          %s1113 = int_to_ptr.vmem [resolvable:$true] %s1112
          %1118 = dma.vmem_to_hbm [thread:$0]  %s1113, 1024, %s1111, %s1067, 128, 128, 8
        $region104: #{tpu_custom_call.1} parent=55 // pred_fallthru
          _
      $region56: #{tpu_custom_call.1} parent=5 // pred_fallthru
        _
      %p1119 = scmp.le.s32.totalorder 2, %s33
      // Predicated region
      $region105: #{tpu_custom_call.1} parent=5 // pred_check
        %p1120 = pneg %p1119
      $region106: #{tpu_custom_call.1} parent=5 // pred_check_branch
        %1122 = sbr.rel (%p1120) target = $region108
      $region107: #{tpu_custom_call.1} parent=5 // pred_region
        %s1123 = ssub.s32 %s33, 2
        // Predicated region
        $region109: #{tpu_custom_call.1} parent=107 // pred_check
          %p1124 = pneg %p266
        $region110: #{tpu_custom_call.1} parent=107 // pred_check_branch
          %1126 = sbr.rel (%p1124) target = $region112
        $region111: #{tpu_custom_call.1} parent=107 // pred_region
          %s1127 = sand.u32 %s251, 1
          %s1128 = scalar_lea.sflag [#allocation4], %s1127
          %s1129 = sand.u32 %s251, 1
          %s1130 = smul.addr %s1129, 64
          %s1131 = scalar_lea.vmem [#allocation17], %s1130
          %1132 = dma.done %s1128, 1024
        $region112: #{tpu_custom_call.1} parent=107 // pred_fallthru
          _
        // Predicated region
        $region113: #{tpu_custom_call.1} parent=107 // pred_check
          %p1133 = pneg %p292
        $region114: #{tpu_custom_call.1} parent=107 // pred_check_branch
          %1135 = sbr.rel (%p1133) target = $region116
        $region115: #{tpu_custom_call.1} parent=107 // pred_region
          %s1136 = sand.u32 %s39, 1
          %s1137 = scalar_lea.sflag [#allocation19], %s1136
          %s1138 = sand.u32 %s277, 1
          %s1139 = smul.addr %s1138, 64
          %s1140 = scalar_lea.vmem [#allocation18], %s1139
          %1141 = dma.done %s1137, 1024
        $region116: #{tpu_custom_call.1} parent=107 // pred_fallthru
          _
        // Predicated region
        $region117: #{tpu_custom_call.1} parent=107 // pred_check
          %p1142 = pneg %p318
        $region118: #{tpu_custom_call.1} parent=107 // pred_check_branch
          %1144 = sbr.rel (%p1142) target = $region120
        $region119: #{tpu_custom_call.1} parent=107 // pred_region
          %s1145 = sand.u32 %s39, 1
          %s1146 = scalar_lea.sflag [#allocation19], %s1145
          %s1147 = sand.u32 %s303, 1
          %s1148 = smul.addr %s1147, 64
          %s1149 = scalar_lea.vmem [#allocation20], %s1148
          %1150 = dma.done %s1146, 1024
        $region120: #{tpu_custom_call.1} parent=107 // pred_fallthru
          _
      $region108: #{tpu_custom_call.1} parent=5 // pred_fallthru
        _
    $region6: #{tpu_custom_call.1} parent=1 // loop_footer
      %s37 = sadd.s32 1, %s33
    $region7: #{tpu_custom_call.1} parent=1 // loop_footer_branch
      %32 = sbr.rel target = $region3
    $region8: #{tpu_custom_call.1} parent=1 // loop_exit
      _
    %1151 = vsyncpa [#allocation3], 1
    %s1152 = scalar_lea.sflag [#allocation3], 1
    %1153 = vsyncpa %s1152, 1
    %1154 = vsyncpa [#allocation6], 1
    %s1155 = scalar_lea.sflag [#allocation6], 1
    %1156 = vsyncpa %s1155, 1
    %1157 = vsyncpa [#allocation9], 1
    %1158 = vsyncpa [#allocation12], 1
    %1159 = vsyncpa [#allocation15], 1
    %1160 = vsyncpa [#allocation4], 1
    %s1161 = scalar_lea.sflag [#allocation4], 1
    %1162 = vsyncpa %s1161, 1
    %1163 = vsyncpa [#allocation19], 1
    %s1164 = scalar_lea.sflag [#allocation19], 1
    %1165 = vsyncpa %s1164, 1

</llo_original>
